<compile_context>
chip_gen: v6e
topology: v6e:2x2x1
jax: 0.10.0
libtpu: 0.0.40
codegen_flags: <defaults>
</compile_context>

<pallas_src>
import jax
import jax.numpy as jnp
from jax.experimental import pallas as pl
from jax.experimental.pallas import tpu as pltpu

KT = 3
KS = 3
N_HIS = 8
N_VERTEX = 16
BATCH = 2
BLOCKS = [[1], [8, 4, 8], [8, 8], [1]]
LN_EPS = 1e-5  # nn.LayerNorm default eps

# Row indices inside the packed (16, 256) parameter slab.
ROW_TC1_B, ROW_GC_B, ROW_TC2_B = 0, 1, 2
ROW_LN1_G, ROW_LN1_B = 3, 4
ROW_OTC_B = 5
ROW_LN2_G, ROW_LN2_B = 6, 7
ROW_FC1_B, ROW_FC2_B = 8, 9


# --------------------------------------------------------------------------
# Fused forward kernel (everything lives in VMEM, single invocation)
# --------------------------------------------------------------------------
def fused_forward_kernel(x_ref, tc1_w_ref, gc_w_ref, tc2_w_ref, otc_w_ref,
                         fc1_w_ref, fc2_w_ref, par_ref, o_ref):

    def temporal_glu(x, w_ref, bias, kt):
        """Causal (Kt,1) conv + GLU on a lane-dense (B, T, V*Ci) slab.

        w_ref: (kt, V*Ci, 2*V*Co) bf16; the Align residual is pre-folded into
        the p-half at tap kt-1, so GLU is simply p * sigmoid(q).  Per-tap
        accumulated dots (no im2col concatenate / wide VMEM copy).
        """
        bsz, t, l = x.shape
        to = t - kt + 1
        n = w_ref.shape[2] // 2
        acc = bias                                      # (2n,) f32, broadcasts
        for k in range(kt):                             # static unroll
            xk = x[:, k:k + to, :].reshape(bsz * to, l).astype(jnp.bfloat16)
            acc = acc + jnp.dot(xk, w_ref[k],
                                preferred_element_type=jnp.float32)
        p = acc[:, :n]
        q = acc[:, n:]
        return (p * jax.nn.sigmoid(q)).reshape(bsz, to, n)

    def layernorm(x2, g, b):
        """nn.LayerNorm([V, C]) over the lane-dense V*C axis (two-pass var)."""
        mu = jnp.mean(x2, axis=-1, keepdims=True)
        xc = x2 - mu
        var = jnp.mean(xc * xc, axis=-1, keepdims=True)
        return xc * jax.lax.rsqrt(var + LN_EPS) * g + b

    x = x_ref[...]                                            # (B, T, V) f32

    # ---- STConvBlock: temporal GLU conv 1 (Align zero-pad folded in) -------
    x = temporal_glu(x, tc1_w_ref, par_ref[ROW_TC1_B, :256], KT)   # (B,6,128)

    # ---- STConvBlock: whole graph-conv block folded into ONE matmul --------
    bsz, t1, l1 = x.shape
    h = x.reshape(bsz * t1, l1).astype(jnp.bfloat16)
    h = jnp.maximum(
        jnp.dot(h, gc_w_ref[...], preferred_element_type=jnp.float32)
        + par_ref[ROW_GC_B, :64], 0.0)
    x = h.reshape(bsz, t1, 64)                                     # (B, 6, 64)

    # ---- STConvBlock: temporal GLU conv 2 (Align zero-pad folded in) -------
    x = temporal_glu(x, tc2_w_ref, par_ref[ROW_TC2_B, :256], KT)   # (B,4,128)

    # ---- STConvBlock: LayerNorm([V, C]); dropout = identity (eval) ---------
    bsz, t2, l2 = x.shape
    x = layernorm(x.reshape(bsz * t2, l2),
                  par_ref[ROW_LN1_G, :128], par_ref[ROW_LN1_B, :128])
    x = x.reshape(bsz, t2, l2)

    # ---- OutputBlock: temporal GLU conv with Kt = Ko (identity align) ------
    x = temporal_glu(x, otc_w_ref, par_ref[ROW_OTC_B, :256], t2)   # (B,1,128)

    # ---- OutputBlock: LayerNorm -> fc1 -> ReLU -> fc2 ----------------------
    # fc2 carries the scaled-change head folded in: T_out == 1 in this config,
    # so prev_values == 0 in the reference module and out = fc2_out*scale+shift.
    bsz, t3, l3 = x.shape                                          # t3 == 1
    h = layernorm(x.reshape(bsz * t3, l3),
                  par_ref[ROW_LN2_G, :128], par_ref[ROW_LN2_B, :128])
    h = jnp.maximum(
        jnp.dot(h.astype(jnp.bfloat16), fc1_w_ref[...],
                preferred_element_type=jnp.float32)
        + par_ref[ROW_FC1_B, :128], 0.0)
    y = (jnp.dot(h.astype(jnp.bfloat16), fc2_w_ref[...],
                 preferred_element_type=jnp.float32)
         + par_ref[ROW_FC2_B, :N_VERTEX])                          # (B*1, V)
    o_ref[...] = y.reshape(bsz, N_VERTEX)


# --------------------------------------------------------------------------
# parameters (deterministic in-script init; shapes follow the PyTorch module)
# --------------------------------------------------------------------------
def init_params(key):
    keys = iter(jax.random.split(key, 32))

    def unif(shape, fan_in):
        bound = 1.0 / (fan_in ** 0.5)
        return jax.random.uniform(next(keys), shape, jnp.float32, -bound, bound)

    p = {}
    c0 = BLOCKS[0][-1]          # 1
    ch = BLOCKS[1]              # [8, 4, 8]
    och = BLOCKS[-2]            # [8, 8]
    end_c = BLOCKS[-1][0]       # 1
    ko = N_HIS - (len(BLOCKS) - 3) * 2 * (KT - 1)
    assert ko > 1

    # STConvBlock / TemporalConvLayer 1: Conv2d(c0 -> 2*ch[0], (Kt,1)), GLU
    p['tc1_w'] = unif((KT, c0, 2 * ch[0]), c0 * KT)   # w[k,i,o] == torch W[o,i,k,0]
    p['tc1_b'] = unif((1, 2 * ch[0]), c0 * KT)
    # GraphConvLayer align 1x1 conv (ch[0]=8 > ch[1]=4)
    p['ga_w'] = unif((ch[0], ch[1]), ch[0])
    p['ga_b'] = unif((1, ch[1]), ch[0])
    # ChebGraphConv weight (Ks, c, c), bias
    p['gc_w'] = unif((KS, ch[1], ch[1]), ch[1] * KS)
    p['gc_b'] = unif((1, ch[1]), ch[1] * KS)
    # TemporalConvLayer 2: Conv2d(ch[1] -> 2*ch[2], (Kt,1)), GLU
    p['tc2_w'] = unif((KT, ch[1], 2 * ch[2]), ch[1] * KT)
    p['tc2_b'] = unif((1, 2 * ch[2]), ch[1] * KT)
    # tc2_ln LayerNorm([V, ch[2]])
    p['ln1_g'] = jnp.ones((N_VERTEX, ch[2]), jnp.float32)
    p['ln1_b'] = jnp.zeros((N_VERTEX, ch[2]), jnp.float32)
    # OutputBlock temporal conv: Conv2d(ch[2] -> 2*och[0], (Ko,1)), GLU
    p['otc_w'] = unif((ko, ch[2], 2 * och[0]), ch[2] * ko)
    p['otc_b'] = unif((1, 2 * och[0]), ch[2] * ko)
    # tc1_ln LayerNorm([V, och[0]])
    p['ln2_g'] = jnp.ones((N_VERTEX, och[0]), jnp.float32)
    p['ln2_b'] = jnp.zeros((N_VERTEX, och[0]), jnp.float32)
    # fc1 / fc2 (Linear weights stored as (in, out))
    p['fc1_w'] = unif((och[0], och[1]), och[0])
    p['fc1_b'] = unif((1, och[1]), och[0])
    p['fc2_w'] = unif((och[1], end_c), och[1])
    p['fc2_b'] = unif((1, end_c), och[1])
    # ScaledSTGCN head: scale_factor = 3.0, shift = 0.0 (module init)
    p['scale_shift'] = jnp.array([[3.0, 0.0]], jnp.float32)
    # synthetic graph shift operator (deterministic, symmetric, row-normalized)
    # (note: a real run would feed the rescaled Laplacian here)
    a = jax.random.uniform(next(keys), (N_VERTEX, N_VERTEX), jnp.float32)
    a = 0.5 * (a + a.T)
    p['gso'] = a / jnp.sum(a, axis=1, keepdims=True)
    return p, ko


# --------------------------------------------------------------------------
# one-time host-side weight prep: lane-dense kron layouts, algebraic folding,
# bf16 cast, bias/LN-parameter packing
# --------------------------------------------------------------------------
def prep_params(p):
    v = N_VERTEX
    eye_v = jnp.eye(v, dtype=jnp.float32)

    def blockdiag(w):                     # (ci, co) -> block-diag (V*ci, V*co)
        return jnp.kron(eye_v, w.astype(jnp.float32))

    def prep_tconv(w, b):
        # w: (kt, ci, 2*co), b: (1, 2*co) -> (kt, V*ci, 2*V*co) bf16, (2*V*co,)
        kt, ci, co2 = w.shape
        co = co2 // 2
        wp = jnp.stack([blockdiag(w[k, :, :co]) for k in range(kt)])
        wq = jnp.stack([blockdiag(w[k, :, co:]) for k in range(kt)])
        # Fold the Align residual (zero-pad for ci<co, identity for ci==co),
        # which is the input at time offset kt-1, into the p-half.
        assert ci <= co
        pad = jnp.concatenate([jnp.eye(ci, dtype=jnp.float32),
                               jnp.zeros((ci, co - ci), jnp.float32)], axis=1)
        wp = wp.at[kt - 1].add(blockdiag(pad))
        w_full = jnp.concatenate([wp, wq], axis=2).astype(jnp.bfloat16)
        b_full = jnp.concatenate([jnp.tile(b[0, :co], v),
                                  jnp.tile(b[0, co:], v)])
        return w_full, b_full

    q = {}
    q['tc1_w'], tc1_b = prep_tconv(p['tc1_w'], p['tc1_b'])   # (3, 16, 256)
    q['tc2_w'], tc2_b = prep_tconv(p['tc2_w'], p['tc2_b'])   # (3, 64, 256)
    q['otc_w'], otc_b = prep_tconv(p['otc_w'], p['otc_b'])   # (4, 128, 256)

    # Graph-conv block folded into ONE matrix:  out = relu(x @ W_eff + b_eff)
    #   W_eff = Ga @ P,   b_eff = ba @ P + bc
    #   P = W0 + G W1 + (2 G^2 - I) W2 + I    (the +I is the residual add)
    cg = p['ga_w'].shape[1]                                    # 4
    ga = blockdiag(p['ga_w'])                                  # (128, 64)
    ba = jnp.tile(p['ga_b'][0], v)                             # (64,)
    gk = jnp.kron(p['gso'].T, jnp.eye(cg, dtype=jnp.float32))  # (64, 64)
    w0, w1, w2 = (blockdiag(p['gc_w'][k]) for k in range(KS))
    eye = jnp.eye(v * cg, dtype=jnp.float32)
    poly = w0 + gk @ w1 + (2.0 * (gk @ gk) - eye) @ w2 + eye
    q['gc_w'] = (ga @ poly).astype(jnp.bfloat16)               # (128, 64)
    gc_b = ba @ poly + jnp.tile(p['gc_b'][0], v)               # (64,)

    # fc1; fc2 with the scaled-change head folded in (T_out == 1 => prev == 0)
    scale = p['scale_shift'][0, 0]
    shift = p['scale_shift'][0, 1]
    q['fc1_w'] = blockdiag(p['fc1_w']).astype(jnp.bfloat16)    # (128, 128)
    fc1_b = jnp.tile(p['fc1_b'][0], v)                         # (128,)
    q['fc2_w'] = (blockdiag(p['fc2_w']) * scale).astype(jnp.bfloat16)  # (128,16)
    fc2_b = jnp.tile(p['fc2_b'][0], v) * scale + shift         # (16,)

    # Pack all small bias / LayerNorm vectors into one lane-dense slab
    # -> a single prologue DMA instead of ~10 tiny ones.
    rows = {ROW_TC1_B: tc1_b, ROW_GC_B: gc_b, ROW_TC2_B: tc2_b,
            ROW_LN1_G: p['ln1_g'].reshape(-1),
            ROW_LN1_B: p['ln1_b'].reshape(-1),
            ROW_OTC_B: otc_b,
            ROW_LN2_G: p['ln2_g'].reshape(-1),
            ROW_LN2_B: p['ln2_b'].reshape(-1),
            ROW_FC1_B: fc1_b, ROW_FC2_B: fc2_b}
    slab = jnp.zeros((16, 256), jnp.float32)
    for r, vec in rows.items():
        slab = slab.at[r, :vec.shape[0]].set(vec)
    q['params'] = slab
    return q


PARAM_ORDER = ('tc1_w', 'gc_w', 'tc2_w', 'otc_w', 'fc1_w', 'fc2_w', 'params')


# --------------------------------------------------------------------------
# forward: one fused pallas_call
# --------------------------------------------------------------------------
@jax.jit
def forward(prepped, x_nchw):
    b, c_in, t, v = x_nchw.shape
    assert c_in == BLOCKS[0][-1] == 1 and v == N_VERTEX
    # NCHW (B, 1, T, V) -> lane-dense slab (B, T, V*C_in); with C_in == 1 this
    # is a pure reshape (no transpose, no copy).
    x = x_nchw.reshape(b, t, v).astype(jnp.float32)

    args = (x,) + tuple(prepped[k] for k in PARAM_ORDER)
    in_specs = [pl.BlockSpec(a.shape, lambda j, nd=a.ndim: (0,) * nd,
                             memory_space=pltpu.MemorySpace.VMEM)
                for a in args]
    out_spec = pl.BlockSpec((b, v), lambda j: (0, 0),
                            memory_space=pltpu.MemorySpace.VMEM)

    y = pl.pallas_call(
        fused_forward_kernel,
        grid=(1,),
        in_specs=in_specs,
        out_specs=out_spec,
        out_shape=jax.ShapeDtypeStruct((b, v), jnp.float32),
        compiler_params=pltpu.CompilerParams(
            dimension_semantics=("arbitrary",)),
        cost_estimate=pl.CostEstimate(flops=2_000_000,
                                      transcendentals=3_000,
                                      bytes_accessed=500_000),
    )(*args)

    # PyTorch output layout: (B, end_channel=1, T_out=1, V)
    return y.reshape(b, 1, 1, v)


if __name__ == "__main__":
    key = jax.random.PRNGKey(0)
    k_param, k_x = jax.random.split(key)
    params, ko = init_params(k_param)
    prepped = prep_params(params)
    # PyTorch input layout NCHW: (batch, c_in=blocks[0][-1], n_his, n_vertex)
    x = jax.random.normal(k_x, (BATCH, BLOCKS[0][-1], N_HIS, N_VERTEX),
                          jnp.float32)
    y = forward(prepped, x)
    y = jax.block_until_ready(y)
    assert y.shape == (BATCH, BLOCKS[-1][0], 1, N_VERTEX), y.shape
    assert bool(jnp.all(jnp.isfinite(y)))
    print("KERNEL_OK")
</pallas_src>

<mosaic_0001>
module attributes {stable_mosaic.version = 11 : i64} {
  func.func @fused_forward_kernel(%arg0: i32, %arg1: memref<2x8x16xf32, #tpu.memory_space<vmem>>, %arg2: memref<3x16x256xbf16, #tpu.memory_space<vmem>>, %arg3: memref<128x64xbf16, #tpu.memory_space<vmem>>, %arg4: memref<3x64x256xbf16, #tpu.memory_space<vmem>>, %arg5: memref<4x128x256xbf16, #tpu.memory_space<vmem>>, %arg6: memref<128x128xbf16, #tpu.memory_space<vmem>>, %arg7: memref<128x16xbf16, #tpu.memory_space<vmem>>, %arg8: memref<16x256xf32, #tpu.memory_space<vmem>>, %arg9: memref<2x16xf32, #tpu.memory_space<vmem>>) attributes {dimension_semantics = [#tpu.dimension_semantics<arbitrary>], iteration_bounds = array<i64: 1>, scalar_prefetch = 0 : i64, scratch_operands = 0 : i64, tpu.core_type = #tpu.core_type<tc>, window_params = [{pipeline_mode = #tpu.pipeline_mode<synchronous>, transform_indices = @transform_0, window_bounds = array<i64: 2, 8, 16>}, {pipeline_mode = #tpu.pipeline_mode<synchronous>, transform_indices = @transform_1, window_bounds = array<i64: 3, 16, 256>}, {pipeline_mode = #tpu.pipeline_mode<synchronous>, transform_indices = @transform_2, window_bounds = array<i64: 128, 64>}, {pipeline_mode = #tpu.pipeline_mode<synchronous>, transform_indices = @transform_3, window_bounds = array<i64: 3, 64, 256>}, {pipeline_mode = #tpu.pipeline_mode<synchronous>, transform_indices = @transform_4, window_bounds = array<i64: 4, 128, 256>}, {pipeline_mode = #tpu.pipeline_mode<synchronous>, transform_indices = @transform_5, window_bounds = array<i64: 128, 128>}, {pipeline_mode = #tpu.pipeline_mode<synchronous>, transform_indices = @transform_6, window_bounds = array<i64: 128, 16>}, {pipeline_mode = #tpu.pipeline_mode<synchronous>, transform_indices = @transform_7, window_bounds = array<i64: 16, 256>}, {pipeline_mode = #tpu.pipeline_mode<synchronous>, transform_indices = @transform_8, window_bounds = array<i64: 2, 16>}]} {
    %c0 = arith.constant 0 : index
    %c0_0 = arith.constant 0 : index
    %c0_1 = arith.constant 0 : index
    %0 = vector.load %arg1[%c0, %c0_0, %c0_1] : memref<2x8x16xf32, #tpu.memory_space<vmem>>, vector<2x8x16xf32>
    %c0_2 = arith.constant 0 : index
    %c0_3 = arith.constant 0 : index
    %1 = vector.load %arg8[%c0_2, %c0_3] : memref<16x256xf32, #tpu.memory_space<vmem>>, vector<1x256xf32>
    %2 = vector.shape_cast %1 : vector<1x256xf32> to vector<256xf32>
    %3 = vector.extract_strided_slice %0 {offsets = [0, 0, 0], sizes = [2, 6, 16], strides = [1, 1, 1]} : vector<2x8x16xf32> to vector<2x6x16xf32>
    %4 = vector.shape_cast %3 : vector<2x6x16xf32> to vector<12x16xf32>
    %5 = arith.truncf %4 : vector<12x16xf32> to vector<12x16xbf16>
    %c0_4 = arith.constant 0 : index
    %c0_5 = arith.constant 0 : index
    %c0_6 = arith.constant 0 : index
    %6 = vector.load %arg2[%c0_4, %c0_5, %c0_6] : memref<3x16x256xbf16, #tpu.memory_space<vmem>>, vector<1x16x256xbf16>
    %7 = vector.shape_cast %6 : vector<1x16x256xbf16> to vector<16x256xbf16>
    %cst = arith.constant dense<0.000000e+00> : vector<12x256xf32>
    %8 = tpu.matmul %5, %7, %cst {dimension_numbers = #tpu.dot_dimension_numbers<[1], [0], [0], [1], [0, 0, 1, 1], [], []>} : vector<12x16xbf16>, vector<16x256xbf16>, vector<12x256xf32> -> vector<12x256xf32>
    %9 = vector.shape_cast %2 : vector<256xf32> to vector<1x256xf32>
    %10 = vector.broadcast %9 : vector<1x256xf32> to vector<12x256xf32>
    %11 = arith.addf %10, %8 : vector<12x256xf32>
    %12 = vector.extract_strided_slice %0 {offsets = [0, 1, 0], sizes = [2, 6, 16], strides = [1, 1, 1]} : vector<2x8x16xf32> to vector<2x6x16xf32>
    %13 = vector.shape_cast %12 : vector<2x6x16xf32> to vector<12x16xf32>
    %14 = arith.truncf %13 : vector<12x16xf32> to vector<12x16xbf16>
    %c1 = arith.constant 1 : index
    %c0_7 = arith.constant 0 : index
    %c0_8 = arith.constant 0 : index
    %15 = vector.load %arg2[%c1, %c0_7, %c0_8] : memref<3x16x256xbf16, #tpu.memory_space<vmem>>, vector<1x16x256xbf16>
    %16 = vector.shape_cast %15 : vector<1x16x256xbf16> to vector<16x256xbf16>
    %cst_9 = arith.constant dense<0.000000e+00> : vector<12x256xf32>
    %17 = tpu.matmul %14, %16, %cst_9 {dimension_numbers = #tpu.dot_dimension_numbers<[1], [0], [0], [1], [0, 0, 1, 1], [], []>} : vector<12x16xbf16>, vector<16x256xbf16>, vector<12x256xf32> -> vector<12x256xf32>
    %18 = arith.addf %11, %17 : vector<12x256xf32>
    %19 = vector.extract_strided_slice %0 {offsets = [0, 2, 0], sizes = [2, 6, 16], strides = [1, 1, 1]} : vector<2x8x16xf32> to vector<2x6x16xf32>
    %20 = vector.shape_cast %19 : vector<2x6x16xf32> to vector<12x16xf32>
    %21 = arith.truncf %20 : vector<12x16xf32> to vector<12x16xbf16>
    %c2 = arith.constant 2 : index
    %c0_10 = arith.constant 0 : index
    %c0_11 = arith.constant 0 : index
    %22 = vector.load %arg2[%c2, %c0_10, %c0_11] : memref<3x16x256xbf16, #tpu.memory_space<vmem>>, vector<1x16x256xbf16>
    %23 = vector.shape_cast %22 : vector<1x16x256xbf16> to vector<16x256xbf16>
    %cst_12 = arith.constant dense<0.000000e+00> : vector<12x256xf32>
    %24 = tpu.matmul %21, %23, %cst_12 {dimension_numbers = #tpu.dot_dimension_numbers<[1], [0], [0], [1], [0, 0, 1, 1], [], []>} : vector<12x16xbf16>, vector<16x256xbf16>, vector<12x256xf32> -> vector<12x256xf32>
    %25 = arith.addf %18, %24 : vector<12x256xf32>
    %26 = vector.extract_strided_slice %25 {offsets = [0, 0], sizes = [12, 128], strides = [1, 1]} : vector<12x256xf32> to vector<12x128xf32>
    %27 = vector.extract_strided_slice %25 {offsets = [0, 128], sizes = [12, 128], strides = [1, 1]} : vector<12x256xf32> to vector<12x128xf32>
    %28 = arith.negf %27 : vector<12x128xf32>
    %29 = math.exp %28 : vector<12x128xf32>
    %cst_13 = arith.constant 1.000000e+00 : f32
    %30 = vector.broadcast %cst_13 : f32 to vector<12x128xf32>
    %31 = arith.addf %30, %29 : vector<12x128xf32>
    %32 = arith.divf %30, %31 : vector<12x128xf32>
    %33 = arith.mulf %26, %32 : vector<12x128xf32>
    %34 = vector.shape_cast %33 : vector<12x128xf32> to vector<2x6x128xf32>
    %35 = vector.shape_cast %34 : vector<2x6x128xf32> to vector<12x128xf32>
    %36 = arith.truncf %35 : vector<12x128xf32> to vector<12x128xbf16>
    %c0_14 = arith.constant 0 : index
    %c0_15 = arith.constant 0 : index
    %37 = vector.load %arg3[%c0_14, %c0_15] : memref<128x64xbf16, #tpu.memory_space<vmem>>, vector<128x64xbf16>
    %cst_16 = arith.constant dense<0.000000e+00> : vector<12x64xf32>
    %38 = tpu.matmul %36, %37, %cst_16 {dimension_numbers = #tpu.dot_dimension_numbers<[1], [0], [0], [1], [0, 0, 1, 1], [], []>} : vector<12x128xbf16>, vector<128x64xbf16>, vector<12x64xf32> -> vector<12x64xf32>
    %c1_17 = arith.constant 1 : index
    %c0_18 = arith.constant 0 : index
    %39 = vector.load %arg8[%c1_17, %c0_18] : memref<16x256xf32, #tpu.memory_space<vmem>>, vector<1x64xf32>
    %40 = vector.shape_cast %39 : vector<1x64xf32> to vector<64xf32>
    %41 = vector.shape_cast %40 : vector<64xf32> to vector<1x64xf32>
    %42 = vector.broadcast %41 : vector<1x64xf32> to vector<12x64xf32>
    %43 = arith.addf %38, %42 : vector<12x64xf32>
    %cst_19 = arith.constant 0.000000e+00 : f32
    %44 = vector.broadcast %cst_19 : f32 to vector<12x64xf32>
    %45 = arith.maximumf %43, %44 : vector<12x64xf32>
    %46 = vector.shape_cast %45 : vector<12x64xf32> to vector<2x6x64xf32>
    %c2_20 = arith.constant 2 : index
    %c0_21 = arith.constant 0 : index
    %47 = vector.load %arg8[%c2_20, %c0_21] : memref<16x256xf32, #tpu.memory_space<vmem>>, vector<1x256xf32>
    %48 = vector.shape_cast %47 : vector<1x256xf32> to vector<256xf32>
    %49 = vector.extract_strided_slice %46 {offsets = [0, 0, 0], sizes = [2, 4, 64], strides = [1, 1, 1]} : vector<2x6x64xf32> to vector<2x4x64xf32>
    %50 = vector.shape_cast %49 : vector<2x4x64xf32> to vector<8x64xf32>
    %51 = arith.truncf %50 : vector<8x64xf32> to vector<8x64xbf16>
    %c0_22 = arith.constant 0 : index
    %c0_23 = arith.constant 0 : index
    %c0_24 = arith.constant 0 : index
    %52 = vector.load %arg4[%c0_22, %c0_23, %c0_24] : memref<3x64x256xbf16, #tpu.memory_space<vmem>>, vector<1x64x256xbf16>
    %53 = vector.shape_cast %52 : vector<1x64x256xbf16> to vector<64x256xbf16>
    %cst_25 = arith.constant dense<0.000000e+00> : vector<8x256xf32>
    %54 = tpu.matmul %51, %53, %cst_25 {dimension_numbers = #tpu.dot_dimension_numbers<[1], [0], [0], [1], [0, 0, 1, 1], [], []>} : vector<8x64xbf16>, vector<64x256xbf16>, vector<8x256xf32> -> vector<8x256xf32>
    %55 = vector.shape_cast %48 : vector<256xf32> to vector<1x256xf32>
    %56 = vector.broadcast %55 : vector<1x256xf32> to vector<8x256xf32>
    %57 = arith.addf %56, %54 : vector<8x256xf32>
    %58 = vector.extract_strided_slice %46 {offsets = [0, 1, 0], sizes = [2, 4, 64], strides = [1, 1, 1]} : vector<2x6x64xf32> to vector<2x4x64xf32>
    %59 = vector.shape_cast %58 : vector<2x4x64xf32> to vector<8x64xf32>
    %60 = arith.truncf %59 : vector<8x64xf32> to vector<8x64xbf16>
    %c1_26 = arith.constant 1 : index
    %c0_27 = arith.constant 0 : index
    %c0_28 = arith.constant 0 : index
    %61 = vector.load %arg4[%c1_26, %c0_27, %c0_28] : memref<3x64x256xbf16, #tpu.memory_space<vmem>>, vector<1x64x256xbf16>
    %62 = vector.shape_cast %61 : vector<1x64x256xbf16> to vector<64x256xbf16>
    %cst_29 = arith.constant dense<0.000000e+00> : vector<8x256xf32>
    %63 = tpu.matmul %60, %62, %cst_29 {dimension_numbers = #tpu.dot_dimension_numbers<[1], [0], [0], [1], [0, 0, 1, 1], [], []>} : vector<8x64xbf16>, vector<64x256xbf16>, vector<8x256xf32> -> vector<8x256xf32>
    %64 = arith.addf %57, %63 : vector<8x256xf32>
    %65 = vector.extract_strided_slice %46 {offsets = [0, 2, 0], sizes = [2, 4, 64], strides = [1, 1, 1]} : vector<2x6x64xf32> to vector<2x4x64xf32>
    %66 = vector.shape_cast %65 : vector<2x4x64xf32> to vector<8x64xf32>
    %67 = arith.truncf %66 : vector<8x64xf32> to vector<8x64xbf16>
    %c2_30 = arith.constant 2 : index
    %c0_31 = arith.constant 0 : index
    %c0_32 = arith.constant 0 : index
    %68 = vector.load %arg4[%c2_30, %c0_31, %c0_32] : memref<3x64x256xbf16, #tpu.memory_space<vmem>>, vector<1x64x256xbf16>
    %69 = vector.shape_cast %68 : vector<1x64x256xbf16> to vector<64x256xbf16>
    %cst_33 = arith.constant dense<0.000000e+00> : vector<8x256xf32>
    %70 = tpu.matmul %67, %69, %cst_33 {dimension_numbers = #tpu.dot_dimension_numbers<[1], [0], [0], [1], [0, 0, 1, 1], [], []>} : vector<8x64xbf16>, vector<64x256xbf16>, vector<8x256xf32> -> vector<8x256xf32>
    %71 = arith.addf %64, %70 : vector<8x256xf32>
    %72 = vector.extract_strided_slice %71 {offsets = [0, 0], sizes = [8, 128], strides = [1, 1]} : vector<8x256xf32> to vector<8x128xf32>
    %73 = vector.extract_strided_slice %71 {offsets = [0, 128], sizes = [8, 128], strides = [1, 1]} : vector<8x256xf32> to vector<8x128xf32>
    %74 = arith.negf %73 : vector<8x128xf32>
    %75 = math.exp %74 : vector<8x128xf32>
    %cst_34 = arith.constant 1.000000e+00 : f32
    %76 = vector.broadcast %cst_34 : f32 to vector<8x128xf32>
    %77 = arith.addf %76, %75 : vector<8x128xf32>
    %78 = arith.divf %76, %77 : vector<8x128xf32>
    %79 = arith.mulf %72, %78 : vector<8x128xf32>
    %80 = vector.shape_cast %79 : vector<8x128xf32> to vector<2x4x128xf32>
    %81 = vector.shape_cast %80 : vector<2x4x128xf32> to vector<8x128xf32>
    %c3 = arith.constant 3 : index
    %c0_35 = arith.constant 0 : index
    %82 = vector.load %arg8[%c3, %c0_35] : memref<16x256xf32, #tpu.memory_space<vmem>>, vector<1x128xf32>
    %83 = vector.shape_cast %82 : vector<1x128xf32> to vector<128xf32>
    %c4 = arith.constant 4 : index
    %c0_36 = arith.constant 0 : index
    %84 = vector.load %arg8[%c4, %c0_36] : memref<16x256xf32, #tpu.memory_space<vmem>>, vector<1x128xf32>
    %85 = vector.shape_cast %84 : vector<1x128xf32> to vector<128xf32>
    %cst_37 = arith.constant dense<0.000000e+00> : vector<8xf32>
    %86 = vector.multi_reduction <add>, %81, %cst_37 [1] : vector<8x128xf32> to vector<8xf32>
    %87 = vector.shape_cast %86 : vector<8xf32> to vector<8x1xf32>
    %cst_38 = arith.constant 1.280000e+02 : f32
    %88 = vector.broadcast %cst_38 : f32 to vector<8x1xf32>
    %89 = arith.divf %87, %88 : vector<8x1xf32>
    %90 = vector.broadcast %89 : vector<8x1xf32> to vector<8x128xf32>
    %91 = arith.subf %81, %90 : vector<8x128xf32>
    %92 = arith.mulf %91, %91 : vector<8x128xf32>
    %cst_39 = arith.constant dense<0.000000e+00> : vector<8xf32>
    %93 = vector.multi_reduction <add>, %92, %cst_39 [1] : vector<8x128xf32> to vector<8xf32>
    %94 = vector.shape_cast %93 : vector<8xf32> to vector<8x1xf32>
    %cst_40 = arith.constant 1.280000e+02 : f32
    %95 = vector.broadcast %cst_40 : f32 to vector<8x1xf32>
    %96 = arith.divf %94, %95 : vector<8x1xf32>
    %cst_41 = arith.constant 9.99999974E-6 : f32
    %97 = vector.broadcast %cst_41 : f32 to vector<8x1xf32>
    %98 = arith.addf %96, %97 : vector<8x1xf32>
    %99 = math.rsqrt %98 : vector<8x1xf32>
    %100 = vector.broadcast %99 : vector<8x1xf32> to vector<8x128xf32>
    %101 = arith.mulf %91, %100 : vector<8x128xf32>
    %102 = vector.shape_cast %83 : vector<128xf32> to vector<1x128xf32>
    %103 = vector.broadcast %102 : vector<1x128xf32> to vector<8x128xf32>
    %104 = arith.mulf %101, %103 : vector<8x128xf32>
    %105 = vector.shape_cast %85 : vector<128xf32> to vector<1x128xf32>
    %106 = vector.broadcast %105 : vector<1x128xf32> to vector<8x128xf32>
    %107 = arith.addf %104, %106 : vector<8x128xf32>
    %108 = vector.shape_cast %107 : vector<8x128xf32> to vector<2x4x128xf32>
    %c5 = arith.constant 5 : index
    %c0_42 = arith.constant 0 : index
    %109 = vector.load %arg8[%c5, %c0_42] : memref<16x256xf32, #tpu.memory_space<vmem>>, vector<1x256xf32>
    %110 = vector.shape_cast %109 : vector<1x256xf32> to vector<256xf32>
    %111 = vector.extract_strided_slice %108 {offsets = [0, 0, 0], sizes = [2, 1, 128], strides = [1, 1, 1]} : vector<2x4x128xf32> to vector<2x1x128xf32>
    %112 = vector.shape_cast %111 : vector<2x1x128xf32> to vector<2x128xf32>
    %113 = arith.truncf %112 : vector<2x128xf32> to vector<2x128xbf16>
    %c0_43 = arith.constant 0 : index
    %c0_44 = arith.constant 0 : index
    %c0_45 = arith.constant 0 : index
    %114 = vector.load %arg5[%c0_43, %c0_44, %c0_45] : memref<4x128x256xbf16, #tpu.memory_space<vmem>>, vector<1x128x256xbf16>
    %115 = vector.shape_cast %114 : vector<1x128x256xbf16> to vector<128x256xbf16>
    %cst_46 = arith.constant dense<0.000000e+00> : vector<2x256xf32>
    %116 = tpu.matmul %113, %115, %cst_46 {dimension_numbers = #tpu.dot_dimension_numbers<[1], [0], [0], [1], [0, 0, 1, 1], [], []>} : vector<2x128xbf16>, vector<128x256xbf16>, vector<2x256xf32> -> vector<2x256xf32>
    %117 = vector.shape_cast %110 : vector<256xf32> to vector<1x256xf32>
    %118 = vector.broadcast %117 : vector<1x256xf32> to vector<2x256xf32>
    %119 = arith.addf %118, %116 : vector<2x256xf32>
    %120 = vector.extract_strided_slice %108 {offsets = [0, 1, 0], sizes = [2, 1, 128], strides = [1, 1, 1]} : vector<2x4x128xf32> to vector<2x1x128xf32>
    %121 = vector.shape_cast %120 : vector<2x1x128xf32> to vector<2x128xf32>
    %122 = arith.truncf %121 : vector<2x128xf32> to vector<2x128xbf16>
    %c1_47 = arith.constant 1 : index
    %c0_48 = arith.constant 0 : index
    %c0_49 = arith.constant 0 : index
    %123 = vector.load %arg5[%c1_47, %c0_48, %c0_49] : memref<4x128x256xbf16, #tpu.memory_space<vmem>>, vector<1x128x256xbf16>
    %124 = vector.shape_cast %123 : vector<1x128x256xbf16> to vector<128x256xbf16>
    %cst_50 = arith.constant dense<0.000000e+00> : vector<2x256xf32>
    %125 = tpu.matmul %122, %124, %cst_50 {dimension_numbers = #tpu.dot_dimension_numbers<[1], [0], [0], [1], [0, 0, 1, 1], [], []>} : vector<2x128xbf16>, vector<128x256xbf16>, vector<2x256xf32> -> vector<2x256xf32>
    %126 = arith.addf %119, %125 : vector<2x256xf32>
    %127 = vector.extract_strided_slice %108 {offsets = [0, 2, 0], sizes = [2, 1, 128], strides = [1, 1, 1]} : vector<2x4x128xf32> to vector<2x1x128xf32>
    %128 = vector.shape_cast %127 : vector<2x1x128xf32> to vector<2x128xf32>
    %129 = arith.truncf %128 : vector<2x128xf32> to vector<2x128xbf16>
    %c2_51 = arith.constant 2 : index
    %c0_52 = arith.constant 0 : index
    %c0_53 = arith.constant 0 : index
    %130 = vector.load %arg5[%c2_51, %c0_52, %c0_53] : memref<4x128x256xbf16, #tpu.memory_space<vmem>>, vector<1x128x256xbf16>
    %131 = vector.shape_cast %130 : vector<1x128x256xbf16> to vector<128x256xbf16>
    %cst_54 = arith.constant dense<0.000000e+00> : vector<2x256xf32>
    %132 = tpu.matmul %129, %131, %cst_54 {dimension_numbers = #tpu.dot_dimension_numbers<[1], [0], [0], [1], [0, 0, 1, 1], [], []>} : vector<2x128xbf16>, vector<128x256xbf16>, vector<2x256xf32> -> vector<2x256xf32>
    %133 = arith.addf %126, %132 : vector<2x256xf32>
    %134 = vector.extract_strided_slice %108 {offsets = [0, 3, 0], sizes = [2, 1, 128], strides = [1, 1, 1]} : vector<2x4x128xf32> to vector<2x1x128xf32>
    %135 = vector.shape_cast %134 : vector<2x1x128xf32> to vector<2x128xf32>
    %136 = arith.truncf %135 : vector<2x128xf32> to vector<2x128xbf16>
    %c3_55 = arith.constant 3 : index
    %c0_56 = arith.constant 0 : index
    %c0_57 = arith.constant 0 : index
    %137 = vector.load %arg5[%c3_55, %c0_56, %c0_57] : memref<4x128x256xbf16, #tpu.memory_space<vmem>>, vector<1x128x256xbf16>
    %138 = vector.shape_cast %137 : vector<1x128x256xbf16> to vector<128x256xbf16>
    %cst_58 = arith.constant dense<0.000000e+00> : vector<2x256xf32>
    %139 = tpu.matmul %136, %138, %cst_58 {dimension_numbers = #tpu.dot_dimension_numbers<[1], [0], [0], [1], [0, 0, 1, 1], [], []>} : vector<2x128xbf16>, vector<128x256xbf16>, vector<2x256xf32> -> vector<2x256xf32>
    %140 = arith.addf %133, %139 : vector<2x256xf32>
    %141 = vector.extract_strided_slice %140 {offsets = [0, 0], sizes = [2, 128], strides = [1, 1]} : vector<2x256xf32> to vector<2x128xf32>
    %142 = vector.extract_strided_slice %140 {offsets = [0, 128], sizes = [2, 128], strides = [1, 1]} : vector<2x256xf32> to vector<2x128xf32>
    %143 = arith.negf %142 : vector<2x128xf32>
    %144 = math.exp %143 : vector<2x128xf32>
    %cst_59 = arith.constant 1.000000e+00 : f32
    %145 = vector.broadcast %cst_59 : f32 to vector<2x128xf32>
    %146 = arith.addf %145, %144 : vector<2x128xf32>
    %147 = arith.divf %145, %146 : vector<2x128xf32>
    %148 = arith.mulf %141, %147 : vector<2x128xf32>
    %149 = vector.shape_cast %148 : vector<2x128xf32> to vector<2x1x128xf32>
    %150 = vector.shape_cast %149 : vector<2x1x128xf32> to vector<2x128xf32>
    %c6 = arith.constant 6 : index
    %c0_60 = arith.constant 0 : index
    %151 = vector.load %arg8[%c6, %c0_60] : memref<16x256xf32, #tpu.memory_space<vmem>>, vector<1x128xf32>
    %152 = vector.shape_cast %151 : vector<1x128xf32> to vector<128xf32>
    %c7 = arith.constant 7 : index
    %c0_61 = arith.constant 0 : index
    %153 = vector.load %arg8[%c7, %c0_61] : memref<16x256xf32, #tpu.memory_space<vmem>>, vector<1x128xf32>
    %154 = vector.shape_cast %153 : vector<1x128xf32> to vector<128xf32>
    %cst_62 = arith.constant dense<0.000000e+00> : vector<2xf32>
    %155 = vector.multi_reduction <add>, %150, %cst_62 [1] : vector<2x128xf32> to vector<2xf32>
    %156 = vector.shape_cast %155 : vector<2xf32> to vector<2x1xf32>
    %cst_63 = arith.constant 1.280000e+02 : f32
    %157 = vector.broadcast %cst_63 : f32 to vector<2x1xf32>
    %158 = arith.divf %156, %157 : vector<2x1xf32>
    %159 = vector.broadcast %158 : vector<2x1xf32> to vector<2x128xf32>
    %160 = arith.subf %150, %159 : vector<2x128xf32>
    %161 = arith.mulf %160, %160 : vector<2x128xf32>
    %cst_64 = arith.constant dense<0.000000e+00> : vector<2xf32>
    %162 = vector.multi_reduction <add>, %161, %cst_64 [1] : vector<2x128xf32> to vector<2xf32>
    %163 = vector.shape_cast %162 : vector<2xf32> to vector<2x1xf32>
    %cst_65 = arith.constant 1.280000e+02 : f32
    %164 = vector.broadcast %cst_65 : f32 to vector<2x1xf32>
    %165 = arith.divf %163, %164 : vector<2x1xf32>
    %cst_66 = arith.constant 9.99999974E-6 : f32
    %166 = vector.broadcast %cst_66 : f32 to vector<2x1xf32>
    %167 = arith.addf %165, %166 : vector<2x1xf32>
    %168 = math.rsqrt %167 : vector<2x1xf32>
    %169 = vector.broadcast %168 : vector<2x1xf32> to vector<2x128xf32>
    %170 = arith.mulf %160, %169 : vector<2x128xf32>
    %171 = vector.shape_cast %152 : vector<128xf32> to vector<1x128xf32>
    %172 = vector.broadcast %171 : vector<1x128xf32> to vector<2x128xf32>
    %173 = arith.mulf %170, %172 : vector<2x128xf32>
    %174 = vector.shape_cast %154 : vector<128xf32> to vector<1x128xf32>
    %175 = vector.broadcast %174 : vector<1x128xf32> to vector<2x128xf32>
    %176 = arith.addf %173, %175 : vector<2x128xf32>
    %177 = arith.truncf %176 : vector<2x128xf32> to vector<2x128xbf16>
    %c0_67 = arith.constant 0 : index
    %c0_68 = arith.constant 0 : index
    %178 = vector.load %arg6[%c0_67, %c0_68] : memref<128x128xbf16, #tpu.memory_space<vmem>>, vector<128x128xbf16>
    %cst_69 = arith.constant dense<0.000000e+00> : vector<2x128xf32>
    %179 = tpu.matmul %177, %178, %cst_69 {dimension_numbers = #tpu.dot_dimension_numbers<[1], [0], [0], [1], [0, 0, 1, 1], [], []>} : vector<2x128xbf16>, vector<128x128xbf16>, vector<2x128xf32> -> vector<2x128xf32>
    %c8 = arith.constant 8 : index
    %c0_70 = arith.constant 0 : index
    %180 = vector.load %arg8[%c8, %c0_70] : memref<16x256xf32, #tpu.memory_space<vmem>>, vector<1x128xf32>
    %181 = vector.shape_cast %180 : vector<1x128xf32> to vector<128xf32>
    %182 = vector.shape_cast %181 : vector<128xf32> to vector<1x128xf32>
    %183 = vector.broadcast %182 : vector<1x128xf32> to vector<2x128xf32>
    %184 = arith.addf %179, %183 : vector<2x128xf32>
    %cst_71 = arith.constant 0.000000e+00 : f32
    %185 = vector.broadcast %cst_71 : f32 to vector<2x128xf32>
    %186 = arith.maximumf %184, %185 : vector<2x128xf32>
    %187 = arith.truncf %186 : vector<2x128xf32> to vector<2x128xbf16>
    %c0_72 = arith.constant 0 : index
    %c0_73 = arith.constant 0 : index
    %188 = vector.load %arg7[%c0_72, %c0_73] : memref<128x16xbf16, #tpu.memory_space<vmem>>, vector<128x16xbf16>
    %cst_74 = arith.constant dense<0.000000e+00> : vector<2x16xf32>
    %189 = tpu.matmul %187, %188, %cst_74 {dimension_numbers = #tpu.dot_dimension_numbers<[1], [0], [0], [1], [0, 0, 1, 1], [], []>} : vector<2x128xbf16>, vector<128x16xbf16>, vector<2x16xf32> -> vector<2x16xf32>
    %c9 = arith.constant 9 : index
    %c0_75 = arith.constant 0 : index
    %190 = vector.load %arg8[%c9, %c0_75] : memref<16x256xf32, #tpu.memory_space<vmem>>, vector<1x16xf32>
    %191 = vector.shape_cast %190 : vector<1x16xf32> to vector<16xf32>
    %192 = vector.shape_cast %191 : vector<16xf32> to vector<1x16xf32>
    %193 = vector.broadcast %192 : vector<1x16xf32> to vector<2x16xf32>
    %194 = arith.addf %189, %193 : vector<2x16xf32>
    %c0_76 = arith.constant 0 : index
    %c0_77 = arith.constant 0 : index
    %195 = vector.load %arg9[%c0_76, %c0_77] : memref<2x16xf32, #tpu.memory_space<vmem>>, vector<2x16xf32>
    tpu.vector_store %arg9[%c0_76, %c0_77], %194 {strides = array<i32>} : memref<2x16xf32, #tpu.memory_space<vmem>>, vector<2x16xf32>,
    return
  }
  func.func @transform_0(%arg0: i32) -> (i32, i32, i32) {
    %c0_i32 = arith.constant 0 : i32
    %c0_i32_0 = arith.constant 0 : i32
    %c0_i32_1 = arith.constant 0 : i32
    %c0_i32_2 = arith.constant 0 : i32
    return %c0_i32, %c0_i32_0, %c0_i32_1 : i32, i32, i32
  }
  func.func @transform_1(%arg0: i32) -> (i32, i32, i32) {
    %c0_i32 = arith.constant 0 : i32
    %c0_i32_0 = arith.constant 0 : i32
    %c0_i32_1 = arith.constant 0 : i32
    %c0_i32_2 = arith.constant 0 : i32
    return %c0_i32, %c0_i32_0, %c0_i32_1 : i32, i32, i32
  }
  func.func @transform_2(%arg0: i32) -> (i32, i32) {
    %c0_i32 = arith.constant 0 : i32
    %c0_i32_0 = arith.constant 0 : i32
    %c0_i32_1 = arith.constant 0 : i32
    return %c0_i32, %c0_i32_0 : i32, i32
  }
  func.func @transform_3(%arg0: i32) -> (i32, i32, i32) {
    %c0_i32 = arith.constant 0 : i32
    %c0_i32_0 = arith.constant 0 : i32
    %c0_i32_1 = arith.constant 0 : i32
    %c0_i32_2 = arith.constant 0 : i32
    return %c0_i32, %c0_i32_0, %c0_i32_1 : i32, i32, i32
  }
  func.func @transform_4(%arg0: i32) -> (i32, i32, i32) {
    %c0_i32 = arith.constant 0 : i32
    %c0_i32_0 = arith.constant 0 : i32
    %c0_i32_1 = arith.constant 0 : i32
    %c0_i32_2 = arith.constant 0 : i32
    return %c0_i32, %c0_i32_0, %c0_i32_1 : i32, i32, i32
  }
  func.func @transform_5(%arg0: i32) -> (i32, i32) {
    %c0_i32 = arith.constant 0 : i32
    %c0_i32_0 = arith.constant 0 : i32
    %c0_i32_1 = arith.constant 0 : i32
    return %c0_i32, %c0_i32_0 : i32, i32
  }
  func.func @transform_6(%arg0: i32) -> (i32, i32) {
    %c0_i32 = arith.constant 0 : i32
    %c0_i32_0 = arith.constant 0 : i32
    %c0_i32_1 = arith.constant 0 : i32
    return %c0_i32, %c0_i32_0 : i32, i32
  }
  func.func @transform_7(%arg0: i32) -> (i32, i32) {
    %c0_i32 = arith.constant 0 : i32
    %c0_i32_0 = arith.constant 0 : i32
    %c0_i32_1 = arith.constant 0 : i32
    return %c0_i32, %c0_i32_0 : i32, i32
  }
  func.func @transform_8(%arg0: i32) -> (i32, i32) {
    %c0_i32 = arith.constant 0 : i32
    %c0_i32_0 = arith.constant 0 : i32
    %c0_i32_1 = arith.constant 0 : i32
    return %c0_i32, %c0_i32_0 : i32, i32
  }
}

</mosaic_0001>

<llo_original>
// kernel: forward.1
$region0: #{forward.1}
  #allocation0 [shape = 'u32[]', space=smem, size = 0x4, offset = 0x4, fixed_abs, tag = 'smem constant byte address 0x4 - core index']
  #allocation1 [shape = 'u32[144,128]{1,0:T(1,128)}', space=vmem, size = 0x12000, scoped, tag = 'internal scratch']
  %s0 = inlined_call_operand.hbm [shape: f32[2,8,16], index: 0, kind: input, shape index: {}]
  %s1 = inlined_call_operand.vmem [shape: bf16[3,16,256], index: 1, kind: input, shape index: {}]
  %s2 = inlined_call_operand.vmem [shape: bf16[128,64], index: 2, kind: input, shape index: {}]
  %s3 = inlined_call_operand.hbm [shape: bf16[3,64,256], index: 3, kind: input, shape index: {}]
  %s4 = inlined_call_operand.hbm [shape: bf16[4,128,256], index: 4, kind: input, shape index: {}]
  %s5 = inlined_call_operand.vmem [shape: bf16[128,128], index: 5, kind: input, shape index: {}]
  %s6 = inlined_call_operand.vmem [shape: bf16[128,16], index: 6, kind: input, shape index: {}]
  %s7 = inlined_call_operand.vmem [shape: f32[16,256], index: 7, kind: input, shape index: {}]
  %s8 = inlined_call_operand.hbm [shape: f32[2,16], index: 8, kind: output, shape index: {}]
  %s9 = sld [smem:[#allocation0]]
  $region54: #{forward.1} parent=0
    _
  %s11 = ssub.s32 1, %s9
  %s12 = scalar_select 0, %s11, %s9
  $region1: #{forward.1} parent=0
    #allocation2 [shape = 'u8[8192]{0}', space=vmem, size = 0x2000, scoped, tag = 'input window, operand 0, single buffered']
    #allocation3 [shape = 's32[1]{0}', space=sflag, size = 0x4, scoped, tag = 'scoped memory for forward.1']
    #allocation4 [shape = 's32[1]{0}', space=sflag, size = 0x4, scoped, tag = 'scoped memory for forward.1']
    #allocation5 [shape = 'u8[98304]{0}', space=vmem, size = 0x18000, scoped, tag = 'input window, operand 3, single buffered']
    #allocation6 [shape = 's32[1]{0}', space=sflag, size = 0x4, scoped, tag = 'scoped memory for forward.1']
    #allocation7 [shape = 'u8[262144]{0}', space=vmem, size = 0x40000, scoped, tag = 'input window, operand 4, single buffered']
    #allocation8 [shape = 'u8[1024]{0}', space=vmem, size = 0x400, scoped, tag = 'output window, operand 0, single buffered']
    %13 = vsyncpa [#allocation3], 0
    %14 = vsyncpa [#allocation6], 0
    %15 = vsyncpa [#allocation4], 0
    // Predicated region
    $region2: #{forward.1} parent=1 // pred_check
      _
    $region3: #{forward.1} parent=1 // pred_check_branch
      %17 = sbr.rel (0) target = $region5
    $region4: #{forward.1} parent=1 // pred_region
      %s19 = ssub.s32 256, 256
      %20 = vsyncadd [#allocation3], %s19
      %s21 = sshll.u32 [#allocation2], 4
      %s22 = int_to_ptr.vmem [resolvable:$true] %s21
      %27 = dma.hbm_to_vmem [thread:$0]  %s0, 256, %s22, [#allocation3], 128, 128, 8
    $region5: #{forward.1} parent=1 // pred_fallthru
      _
    // Predicated region
    $region6: #{forward.1} parent=1 // pred_check
      _
    $region7: #{forward.1} parent=1 // pred_check_branch
      %29 = sbr.rel (0) target = $region9
    $region8: #{forward.1} parent=1 // pred_region
      _
    $region9: #{forward.1} parent=1 // pred_fallthru
      _
    // Predicated region
    $region10: #{forward.1} parent=1 // pred_check
      _
    $region11: #{forward.1} parent=1 // pred_check_branch
      %31 = sbr.rel (0) target = $region13
    $region12: #{forward.1} parent=1 // pred_region
      _
    $region13: #{forward.1} parent=1 // pred_fallthru
      _
    // Predicated region
    $region14: #{forward.1} parent=1 // pred_check
      _
    $region15: #{forward.1} parent=1 // pred_check_branch
      %33 = sbr.rel (0) target = $region17
    $region16: #{forward.1} parent=1 // pred_region
      %s35 = ssub.s32 3072, 3072
      %36 = vsyncadd [#allocation6], %s35
      %s37 = sshll.u32 [#allocation5], 4
      %s38 = int_to_ptr.vmem [resolvable:$true] %s37
      %43 = dma.hbm_to_vmem [thread:$0]  %s3, 3072, %s38, [#allocation6], 128, 128, 8
    $region17: #{forward.1} parent=1 // pred_fallthru
      _
    // Predicated region
    $region18: #{forward.1} parent=1 // pred_check
      _
    $region19: #{forward.1} parent=1 // pred_check_branch
      %45 = sbr.rel (0) target = $region21
    $region20: #{forward.1} parent=1 // pred_region
      %s47 = ssub.s32 8192, 8192
      %48 = vsyncadd [#allocation6], %s47
      %s49 = sshll.u32 [#allocation7], 4
      %s50 = int_to_ptr.vmem [resolvable:$true] %s49
      %55 = dma.hbm_to_vmem [thread:$0]  %s4, 8192, %s50, [#allocation6], 128, 128, 8
    $region21: #{forward.1} parent=1 // pred_fallthru
      _
    // Predicated region
    $region22: #{forward.1} parent=1 // pred_check
      _
    $region23: #{forward.1} parent=1 // pred_check_branch
      %57 = sbr.rel (0) target = $region25
    $region24: #{forward.1} parent=1 // pred_region
      _
    $region25: #{forward.1} parent=1 // pred_fallthru
      _
    // Predicated region
    $region26: #{forward.1} parent=1 // pred_check
      _
    $region27: #{forward.1} parent=1 // pred_check_branch
      %59 = sbr.rel (0) target = $region29
    $region28: #{forward.1} parent=1 // pred_region
      _
    $region29: #{forward.1} parent=1 // pred_fallthru
      _
    // Predicated region
    $region30: #{forward.1} parent=1 // pred_check
      _
    $region31: #{forward.1} parent=1 // pred_check_branch
      %61 = sbr.rel (0) target = $region33
    $region32: #{forward.1} parent=1 // pred_region
      _
    $region33: #{forward.1} parent=1 // pred_fallthru
      _
    // Predicated region
    $region34: #{forward.1} parent=1 // pred_check
      _
    $region35: #{forward.1} parent=1 // pred_check_branch
      %63 = sbr.rel (0) target = $region37
    $region36: #{forward.1} parent=1 // pred_region
      %64 = dma.done [#allocation3], 256
    $region37: #{forward.1} parent=1 // pred_fallthru
      _
    // Predicated region
    $region38: #{forward.1} parent=1 // pred_check
      _
    $region39: #{forward.1} parent=1 // pred_check_branch
      %66 = sbr.rel (0) target = $region41
    $region40: #{forward.1} parent=1 // pred_region
      %67 = dma.done [#allocation6], 3072
    $region41: #{forward.1} parent=1 // pred_fallthru
      _
    // Predicated region
    $region42: #{forward.1} parent=1 // pred_check
      _
    $region43: #{forward.1} parent=1 // pred_check_branch
      %69 = sbr.rel (0) target = $region45
    $region44: #{forward.1} parent=1 // pred_region
      %70 = dma.done [#allocation6], 8192
    $region45: #{forward.1} parent=1 // pred_fallthru
      _
    %v72 = vld [vmem:[#allocation2] sm:$0xff]
    %v73 = vld [vmem:[#allocation2 + $0x8] sm:$0xff]
    %v74 = vld [vmem:[%s7] ss:$8 sm:$0x3]
    %v77 = vcombine.high %v72, %v72
    %v79 = vunpack.c.l.s4 1983009808
    %v80 = vunpack.c.0.s8 %v79
    %v81 = vlaneseq
    %v82 = vshrl.u32 %v81, 7
    %v83 = vsub.s32 %v80, %v82
    %v84 = vrot.slane %v72, %v83
    %v86 = vunpack.c.l.s4 1983009808
    %v87 = vunpack.c.0.s8 %v86
    %v88 = vlaneseq
    %v89 = vshrl.u32 %v88, 7
    %v90 = vsub.s32 %v87, %v89
    %v91 = vrot.slane %v77, %v90
    %v92 = vcombine.high %v84, %v84
    %v93 = vcombine.high %v73, %v73
    %v95 = vunpack.c.l.s4 1983009808
    %v96 = vunpack.c.0.s8 %v95
    %v97 = vlaneseq
    %v98 = vshrl.u32 %v97, 7
    %v99 = vsub.s32 %v96, %v98
    %v100 = vrot.slane %v73, %v99
    %v102 = vunpack.c.l.s4 1983009808
    %v103 = vunpack.c.0.s8 %v102
    %v104 = vlaneseq
    %v105 = vshrl.u32 %v104, 7
    %v106 = vsub.s32 %v103, %v105
    %v107 = vrot.slane %v93, %v106
    %v108 = vcombine.high %v100, %v100
    %v109 = vcombine.low %v84, %v92
    %v110 = vcombine.low %v91, %v100
    %v112 = vunpack.c.l.s4 1983009808
    %v113 = vunpack.c.0.s8 %v112
    %v114 = vlaneseq
    %v115 = vshrl.u32 %v114, 7
    %v116 = vsub.s32 %v113, %v115
    %v117 = vrot.slane %v109, %v116
    %v119 = vunpack.c.l.s4 1983009808
    %v120 = vunpack.c.0.s8 %v119
    %v121 = vlaneseq
    %v122 = vshrl.u32 %v121, 7
    %v123 = vsub.s32 %v120, %v122
    %v124 = vrot.slane %v110, %v123
    %v125 = vcombine.low %v117, %v124
    %v126 = vcombine.low %v108, %v107
    %v128 = vunpack.c.l.s4 1983009808
    %v129 = vunpack.c.0.s8 %v128
    %v130 = vlaneseq
    %v131 = vshrl.u32 %v130, 7
    %v132 = vsub.s32 %v129, %v131
    %v133 = vrot.slane %v126, %v132
    %v136 = vpack.c.bf16 %v133, %v125
    %v137 = vld [vmem:[%s1] sm:$0xff]
    %v138 = vld [vmem:[%s1 + $0x8] sm:$0xff]
    %v141 = vunpack.c.l.b16 %v137
    %v142 = vunpack.c.h.b16 %v137
    %v143 = vunpack.c.l.b16 %v138
    %v144 = vunpack.c.h.b16 %v138
    %v145 = vpack.c.b16 %v143, %v141
    %v146 = vpack.c.b16 %v144, %v142
    %vm149 = vcmask 130048
    %v151 = vsel %vm149, %v136, 0
    %153 = vmatprep.subr.bf16.mxu0 0
    %154 = vmatpush1.bf16.msra.mxu0 0
    %155 = vmatprep.subr.bf16.mxu0 0
    %156 = vmatpush1.bf16.msra.mxu0 0
    %157 = vmatprep.subr.bf16.mxu0 0
    %158 = vmatpush1.bf16.msra.mxu0 0
    %159 = vmatprep.subr.bf16.mxu0 0
    %160 = vmatpush1.bf16.msra.mxu0 0
    %161 = vmatprep.subr.bf16.mxu0 0
    %162 = vmatpush1.bf16.msra.mxu0 0
    %163 = vmatprep.subr.bf16.mxu0 0
    %164 = vmatpush1.bf16.msra.mxu0 0
    %165 = vmatprep.subr.bf16.mxu0 0
    %166 = vmatpush1.bf16.msra.mxu0 0
    %167 = vmatprep.subr.bf16.mxu0 %v146
    %168 = vmatpush1.bf16.msra.mxu0 %v145
    %169 = vmatprep.subr.bf16.mxu0 0
    %170 = vmatpush2.bf16.msra.mxu0 0
    %171 = vmatprep.subr.bf16.mxu0 0
    %172 = vmatpush2.bf16.msra.mxu0 0
    %173 = vmatprep.subr.bf16.mxu0 0
    %174 = vmatpush2.bf16.msra.mxu0 0
    %175 = vmatprep.subr.bf16.mxu0 0
    %176 = vmatpush2.bf16.msra.mxu0 0
    %177 = vmatprep.subr.bf16.mxu0 0
    %178 = vmatpush2.bf16.msra.mxu0 0
    %179 = vmatprep.subr.bf16.mxu0 0
    %180 = vmatpush2.bf16.msra.mxu0 0
    %181 = vmatprep.subr.bf16.mxu0 0
    %182 = vmatpush2.bf16.msra.mxu0 0
    %183 = vmatprep.subr.bf16.mxu0 0
    %184 = vmatpush2.bf16.msra.mxu0 0
    %185 = vmatprep.mubr.bf16.mxu0 0
    %186 = vmatmul.mubr.bf16.gmra.mxu0 %v151
    %v187 = vpop.f32.mrf.mxu0
    %v188 = vadd.f32 0.0, %v187
    %v189 = vpop.f32.mrf.mxu0
    %v190 = vadd.f32 0.0, %v189
    %v191 = vpop.f32.mrf.mxu0
    %v192 = vadd.f32 0.0, %v191
    %v193 = vpop.f32.mrf.mxu0
    %v194 = vadd.f32 0.0, %v193
    %195 = vdwg.mxu0
    %v197 = vlaneseq
    %v198 = vshrl.u32 %v197, 7
    %v199 = vsub.s32 0, %v198
    %v200 = vrot.slane %v74, %v199
    %v201 = vlaneseq
    %v202 = vshrl.u32 %v201, 7
    %v203 = vsub.s32 1, %v202
    %v204 = vrot.slane %v74, %v203
    %v207 = vadd.f32 %v200, %v188
    %v208 = vadd.f32 %v204, %v190
    %v209 = vadd.f32 %v200, %v192
    %v210 = vadd.f32 %v204, %v194
    %v211 = vcombine.high %v91, %v91
    %v212 = vcombine.high %v107, %v107
    %vm213 = vcmask 1040384
    %vm214 = vcmask 1042434
    %vm215 = vmor %vm213, %vm214
    %vm216 = vcmask 1044484
    %vm217 = vmor %vm215, %vm216
    %vm218 = vcmask 1046534
    %vm219 = vmor %vm217, %vm218
    %v220 = vrot.slane %v84, 7
    %v221 = vrot.slane %v220, 2
    %v222 = vrot.slane %v92, 7
    %v223 = vsel %vm219, %v221, %v222
    %v224 = vrot.slane %v222, 2
    %v225 = vrot.slane %v91, 7
    %v226 = vsel %vm219, %v224, %v225
    %v227 = vrot.slane %v225, 2
    %v228 = vrot.slane %v211, 7
    %v229 = vsel %vm219, %v227, %v228
    %v230 = vrot.slane %v100, 7
    %v231 = vrot.slane %v230, 2
    %v232 = vrot.slane %v108, 7
    %v233 = vsel %vm219, %v231, %v232
    %v234 = vrot.slane %v232, 2
    %v235 = vrot.slane %v107, 7
    %v236 = vsel %vm219, %v234, %v235
    %v237 = vrot.slane %v235, 2
    %v238 = vrot.slane %v212, 7
    %v239 = vsel %vm219, %v237, %v238
    %v240 = vcombine.low %v223, %v226
    %v241 = vcombine.low %v229, %v233
    %v243 = vunpack.c.l.s4 1983009808
    %v244 = vunpack.c.0.s8 %v243
    %v245 = vlaneseq
    %v246 = vshrl.u32 %v245, 7
    %v247 = vsub.s32 %v244, %v246
    %v248 = vrot.slane %v240, %v247
    %v250 = vunpack.c.l.s4 1983009808
    %v251 = vunpack.c.0.s8 %v250
    %v252 = vlaneseq
    %v253 = vshrl.u32 %v252, 7
    %v254 = vsub.s32 %v251, %v253
    %v255 = vrot.slane %v241, %v254
    %v256 = vcombine.low %v248, %v255
    %v257 = vcombine.low %v236, %v239
    %v259 = vunpack.c.l.s4 1983009808
    %v260 = vunpack.c.0.s8 %v259
    %v261 = vlaneseq
    %v262 = vshrl.u32 %v261, 7
    %v263 = vsub.s32 %v260, %v262
    %v264 = vrot.slane %v257, %v263
    %v267 = vpack.c.bf16 %v264, %v256
    %s268 = scalar_lea.vmem %s1, 16
    %v269 = vld [vmem:[%s268] sm:$0xff]
    %v270 = vld [vmem:[%s268 + $0x8] sm:$0xff]
    %v273 = vunpack.c.l.b16 %v269
    %v274 = vunpack.c.h.b16 %v269
    %v275 = vunpack.c.l.b16 %v270
    %v276 = vunpack.c.h.b16 %v270
    %v277 = vpack.c.b16 %v275, %v273
    %v278 = vpack.c.b16 %v276, %v274
    %v282 = vsel %vm149, %v267, 0
    %284 = vmatprep.subr.bf16.mxu0 0
    %285 = vmatpush1.bf16.msra.mxu0 0
    %286 = vmatprep.subr.bf16.mxu0 0
    %287 = vmatpush1.bf16.msra.mxu0 0
    %288 = vmatprep.subr.bf16.mxu0 0
    %289 = vmatpush1.bf16.msra.mxu0 0
    %290 = vmatprep.subr.bf16.mxu0 0
    %291 = vmatpush1.bf16.msra.mxu0 0
    %292 = vmatprep.subr.bf16.mxu0 0
    %293 = vmatpush1.bf16.msra.mxu0 0
    %294 = vmatprep.subr.bf16.mxu0 0
    %295 = vmatpush1.bf16.msra.mxu0 0
    %296 = vmatprep.subr.bf16.mxu0 0
    %297 = vmatpush1.bf16.msra.mxu0 0
    %298 = vmatprep.subr.bf16.mxu0 %v278
    %299 = vmatpush1.bf16.msra.mxu0 %v277
    %300 = vmatprep.subr.bf16.mxu0 0
    %301 = vmatpush2.bf16.msra.mxu0 0
    %302 = vmatprep.subr.bf16.mxu0 0
    %303 = vmatpush2.bf16.msra.mxu0 0
    %304 = vmatprep.subr.bf16.mxu0 0
    %305 = vmatpush2.bf16.msra.mxu0 0
    %306 = vmatprep.subr.bf16.mxu0 0
    %307 = vmatpush2.bf16.msra.mxu0 0
    %308 = vmatprep.subr.bf16.mxu0 0
    %309 = vmatpush2.bf16.msra.mxu0 0
    %310 = vmatprep.subr.bf16.mxu0 0
    %311 = vmatpush2.bf16.msra.mxu0 0
    %312 = vmatprep.subr.bf16.mxu0 0
    %313 = vmatpush2.bf16.msra.mxu0 0
    %314 = vmatprep.subr.bf16.mxu0 0
    %315 = vmatpush2.bf16.msra.mxu0 0
    %316 = vmatprep.mubr.bf16.mxu0 0
    %317 = vmatmul.mubr.bf16.gmra.mxu0 %v282
    %v318 = vpop.f32.mrf.mxu0
    %v319 = vadd.f32 0.0, %v318
    %v320 = vpop.f32.mrf.mxu0
    %v321 = vadd.f32 0.0, %v320
    %v322 = vpop.f32.mrf.mxu0
    %v323 = vadd.f32 0.0, %v322
    %v324 = vpop.f32.mrf.mxu0
    %v325 = vadd.f32 0.0, %v324
    %326 = vdwg.mxu0
    %v327 = vadd.f32 %v207, %v319
    %v328 = vadd.f32 %v208, %v321
    %v329 = vadd.f32 %v209, %v323
    %v330 = vadd.f32 %v210, %v325
    %v331 = vcombine.low %v92, %v91
    %v332 = vcombine.low %v211, %v108
    %v334 = vunpack.c.l.s4 1983009808
    %v335 = vunpack.c.0.s8 %v334
    %v336 = vlaneseq
    %v337 = vshrl.u32 %v336, 7
    %v338 = vsub.s32 %v335, %v337
    %v339 = vrot.slane %v331, %v338
    %v341 = vunpack.c.l.s4 1983009808
    %v342 = vunpack.c.0.s8 %v341
    %v343 = vlaneseq
    %v344 = vshrl.u32 %v343, 7
    %v345 = vsub.s32 %v342, %v344
    %v346 = vrot.slane %v332, %v345
    %v347 = vcombine.low %v339, %v346
    %v348 = vcombine.low %v107, %v212
    %v350 = vunpack.c.l.s4 1983009808
    %v351 = vunpack.c.0.s8 %v350
    %v352 = vlaneseq
    %v353 = vshrl.u32 %v352, 7
    %v354 = vsub.s32 %v351, %v353
    %v355 = vrot.slane %v348, %v354
    %v358 = vpack.c.bf16 %v355, %v347
    %s359 = scalar_lea.vmem %s1, 32
    %v360 = vld [vmem:[%s359] sm:$0xff]
    %v361 = vld [vmem:[%s359 + $0x8] sm:$0xff]
    %v364 = vunpack.c.l.b16 %v360
    %v365 = vunpack.c.h.b16 %v360
    %v366 = vunpack.c.l.b16 %v361
    %v367 = vunpack.c.h.b16 %v361
    %v368 = vpack.c.b16 %v366, %v364
    %v369 = vpack.c.b16 %v367, %v365
    %v373 = vsel %vm149, %v358, 0
    %375 = vmatprep.subr.bf16.mxu0 0
    %376 = vmatpush1.bf16.msra.mxu0 0
    %377 = vmatprep.subr.bf16.mxu0 0
    %378 = vmatpush1.bf16.msra.mxu0 0
    %379 = vmatprep.subr.bf16.mxu0 0
    %380 = vmatpush1.bf16.msra.mxu0 0
    %381 = vmatprep.subr.bf16.mxu0 0
    %382 = vmatpush1.bf16.msra.mxu0 0
    %383 = vmatprep.subr.bf16.mxu0 0
    %384 = vmatpush1.bf16.msra.mxu0 0
    %385 = vmatprep.subr.bf16.mxu0 0
    %386 = vmatpush1.bf16.msra.mxu0 0
    %387 = vmatprep.subr.bf16.mxu0 0
    %388 = vmatpush1.bf16.msra.mxu0 0
    %389 = vmatprep.subr.bf16.mxu0 %v369
    %390 = vmatpush1.bf16.msra.mxu0 %v368
    %391 = vmatprep.subr.bf16.mxu0 0
    %392 = vmatpush2.bf16.msra.mxu0 0
    %393 = vmatprep.subr.bf16.mxu0 0
    %394 = vmatpush2.bf16.msra.mxu0 0
    %395 = vmatprep.subr.bf16.mxu0 0
    %396 = vmatpush2.bf16.msra.mxu0 0
    %397 = vmatprep.subr.bf16.mxu0 0
    %398 = vmatpush2.bf16.msra.mxu0 0
    %399 = vmatprep.subr.bf16.mxu0 0
    %400 = vmatpush2.bf16.msra.mxu0 0
    %401 = vmatprep.subr.bf16.mxu0 0
    %402 = vmatpush2.bf16.msra.mxu0 0
    %403 = vmatprep.subr.bf16.mxu0 0
    %404 = vmatpush2.bf16.msra.mxu0 0
    %405 = vmatprep.subr.bf16.mxu0 0
    %406 = vmatpush2.bf16.msra.mxu0 0
    %407 = vmatprep.mubr.bf16.mxu0 0
    %408 = vmatmul.mubr.bf16.gmra.mxu0 %v373
    %v409 = vpop.f32.mrf.mxu0
    %v410 = vadd.f32 0.0, %v409
    %v411 = vpop.f32.mrf.mxu0
    %v412 = vadd.f32 0.0, %v411
    %v413 = vpop.f32.mrf.mxu0
    %v414 = vadd.f32 0.0, %v413
    %v415 = vpop.f32.mrf.mxu0
    %v416 = vadd.f32 0.0, %v415
    %417 = vdwg.mxu0
    %v418 = vadd.f32 %v327, %v410
    %v419 = vadd.f32 %v328, %v412
    %v420 = vadd.f32 %v329, %v414
    %v421 = vadd.f32 %v330, %v416
    %v422 = vxor.u32 %v419, 2147483648
    %v423 = vxor.u32 %v421, 2147483648
    %v424 = vmul.f32 %v422, 1.442695
    %v425 = vpow.pop %v424
    %v426 = vmul.f32 %v423, 1.442695
    %v427 = vpow.pop %v426
    %v428 = vadd.f32 %v425, 1.0
    %v429 = vadd.f32 %v427, 1.0
    %v430 = vrcp.pop %v428
    %v431 = vmul.f32 1.0, %v430
    %v432 = vrcp.pop %v429
    %v433 = vmul.f32 1.0, %v432
    %v434 = vmul.f32 %v418, %v431
    %v435 = vmul.f32 %v420, %v433
    %v436 = vpack.c.bf16 %v435, %v434
    %v437 = vld [vmem:[%s2] sm:$0xf]
    %v438 = vld [vmem:[%s2 + $0x4] sm:$0xf]
    %v439 = vld [vmem:[%s2 + $0x8] sm:$0xf]
    %v440 = vld [vmem:[%s2 + $0xc] sm:$0xf]
    %v441 = vld [vmem:[%s2 + $0x10] sm:$0xf]
    %v442 = vld [vmem:[%s2 + $0x14] sm:$0xf]
    %v443 = vld [vmem:[%s2 + $0x18] sm:$0xf]
    %v444 = vld [vmem:[%s2 + $0x1c] sm:$0xf]
    %v445 = vld [vmem:[%s2 + $0x20] sm:$0xf]
    %v446 = vld [vmem:[%s2 + $0x24] sm:$0xf]
    %v447 = vld [vmem:[%s2 + $0x28] sm:$0xf]
    %v448 = vld [vmem:[%s2 + $0x2c] sm:$0xf]
    %v449 = vld [vmem:[%s2 + $0x30] sm:$0xf]
    %v450 = vld [vmem:[%s2 + $0x34] sm:$0xf]
    %v451 = vld [vmem:[%s2 + $0x38] sm:$0xf]
    %v452 = vld [vmem:[%s2 + $0x3c] sm:$0xf]
    %v453 = vld [vmem:[%s7 + $0x1] ss:$0 sm:$0xff]
    %v470 = vunpack.c.l.b16 %v437
    %v471 = vunpack.c.l.b16 %v438
    %v472 = vunpack.c.l.b16 %v439
    %v473 = vunpack.c.l.b16 %v440
    %v474 = vunpack.c.l.b16 %v441
    %v475 = vunpack.c.l.b16 %v442
    %v476 = vunpack.c.l.b16 %v443
    %v477 = vunpack.c.l.b16 %v444
    %v478 = vunpack.c.l.b16 %v445
    %v479 = vunpack.c.l.b16 %v446
    %v480 = vunpack.c.l.b16 %v447
    %v481 = vunpack.c.l.b16 %v448
    %v482 = vunpack.c.l.b16 %v449
    %v483 = vunpack.c.l.b16 %v450
    %v484 = vunpack.c.l.b16 %v451
    %v485 = vunpack.c.l.b16 %v452
    %v486 = vpack.c.b16 %v471, %v470
    %v487 = vpack.c.b16 %v473, %v472
    %v488 = vpack.c.b16 %v475, %v474
    %v489 = vpack.c.b16 %v477, %v476
    %v490 = vpack.c.b16 %v479, %v478
    %v491 = vpack.c.b16 %v481, %v480
    %v492 = vpack.c.b16 %v483, %v482
    %v493 = vpack.c.b16 %v485, %v484
    %502 = vmatprep.subr.bf16.mxu0 0
    %503 = vmatpush1.bf16.msra.mxu0 %v493
    %504 = vmatprep.subr.bf16.mxu0 0
    %505 = vmatpush1.bf16.msra.mxu0 %v492
    %506 = vmatprep.subr.bf16.mxu0 0
    %507 = vmatpush1.bf16.msra.mxu0 %v491
    %508 = vmatprep.subr.bf16.mxu0 0
    %509 = vmatpush1.bf16.msra.mxu0 %v490
    %510 = vmatprep.subr.bf16.mxu0 0
    %511 = vmatpush1.bf16.msra.mxu0 %v489
    %512 = vmatprep.subr.bf16.mxu0 0
    %513 = vmatpush1.bf16.msra.mxu0 %v488
    %514 = vmatprep.subr.bf16.mxu0 0
    %515 = vmatpush1.bf16.msra.mxu0 %v487
    %516 = vmatprep.subr.bf16.mxu0 0
    %517 = vmatpush1.bf16.msra.mxu0 %v486
    %518 = vmatprep.subr.bf16.mxu0 0
    %519 = vmatpush2.bf16.msra.mxu0 0
    %520 = vmatprep.subr.bf16.mxu0 0
    %521 = vmatpush2.bf16.msra.mxu0 0
    %522 = vmatprep.subr.bf16.mxu0 0
    %523 = vmatpush2.bf16.msra.mxu0 0
    %524 = vmatprep.subr.bf16.mxu0 0
    %525 = vmatpush2.bf16.msra.mxu0 0
    %526 = vmatprep.subr.bf16.mxu0 0
    %527 = vmatpush2.bf16.msra.mxu0 0
    %528 = vmatprep.subr.bf16.mxu0 0
    %529 = vmatpush2.bf16.msra.mxu0 0
    %530 = vmatprep.subr.bf16.mxu0 0
    %531 = vmatpush2.bf16.msra.mxu0 0
    %532 = vmatprep.subr.bf16.mxu0 0
    %533 = vmatpush2.bf16.msra.mxu0 0
    %534 = vmatprep.mubr.bf16.mxu0 0
    %535 = vmatmul.mubr.bf16.gmra.mxu0 %v436
    %v536 = vpop.f32.mrf.mxu0
    %v537 = vadd.f32 %v453, %v536
    %v538 = vpop.f32.mrf.mxu0
    %v539 = vpop.f32.mrf.mxu0
    %v540 = vadd.f32 %v453, %v539
    %v541 = vpop.f32.mrf.mxu0
    %542 = vdwg.mxu0
    %v543 = vmax.f32 %v537, 0.0
    %v544 = vmax.f32 %v540, 0.0
    %v547 = vcombine.high %v543, %v543
    %v549 = vunpack.c.l.s4 1983009808
    %v550 = vunpack.c.0.s8 %v549
    %v551 = vlaneseq
    %v552 = vshrl.u32 %v551, 7
    %v553 = vsub.s32 %v550, %v552
    %v554 = vrot.slane %v543, %v553
    %v556 = vunpack.c.l.s4 1983009808
    %v557 = vunpack.c.0.s8 %v556
    %v558 = vlaneseq
    %v559 = vshrl.u32 %v558, 7
    %v560 = vsub.s32 %v557, %v559
    %v561 = vrot.slane %v547, %v560
    %v562 = vcombine.high %v554, %v554
    %v563 = vcombine.high %v561, %v561
    %v565 = vunpack.c.l.s4 1983009808
    %v566 = vunpack.c.0.s8 %v565
    %v567 = vlaneseq
    %v568 = vshrl.u32 %v567, 7
    %v569 = vsub.s32 %v566, %v568
    %v570 = vrot.slane %v544, %v569
    %v571 = vcombine.high %v570, %v570
    %s572 = scalar_lea.vmem %s7, 2
    %v573 = vld [vmem:[%s572] ss:$8 sm:$0x3]
    %v574 = vcombine.low %v554, %v562
    %v575 = vcombine.low %v563, %v570
    %v577 = vunpack.c.l.s4 1983009808
    %v578 = vunpack.c.0.s8 %v577
    %v579 = vlaneseq
    %v580 = vshrl.u32 %v579, 7
    %v581 = vsub.s32 %v578, %v580
    %v582 = vrot.slane %v574, %v581
    %v584 = vunpack.c.l.s4 1983009808
    %v585 = vunpack.c.0.s8 %v584
    %v586 = vlaneseq
    %v587 = vshrl.u32 %v586, 7
    %v588 = vsub.s32 %v585, %v587
    %v589 = vrot.slane %v575, %v588
    %v590 = vcombine.low %v582, %v589
    %v592 = vpack.c.bf16 %v590, %v590
    %v593 = vld [vmem:[#allocation5] sm:$0xff]
    %v594 = vld [vmem:[#allocation5 + $0x8] sm:$0xff]
    %v595 = vld [vmem:[#allocation5 + $0x10] sm:$0xff]
    %v596 = vld [vmem:[#allocation5 + $0x18] sm:$0xff]
    %v597 = vld [vmem:[#allocation5 + $0x20] sm:$0xff]
    %v598 = vld [vmem:[#allocation5 + $0x28] sm:$0xff]
    %v599 = vld [vmem:[#allocation5 + $0x30] sm:$0xff]
    %v600 = vld [vmem:[#allocation5 + $0x38] sm:$0xff]
    %v609 = vunpack.c.l.b16 %v593
    %v610 = vunpack.c.h.b16 %v593
    %v611 = vunpack.c.l.b16 %v594
    %v612 = vunpack.c.h.b16 %v594
    %v613 = vunpack.c.l.b16 %v595
    %v614 = vunpack.c.h.b16 %v595
    %v615 = vunpack.c.l.b16 %v596
    %v616 = vunpack.c.h.b16 %v596
    %v617 = vunpack.c.l.b16 %v597
    %v618 = vunpack.c.h.b16 %v597
    %v619 = vunpack.c.l.b16 %v598
    %v620 = vunpack.c.h.b16 %v598
    %v621 = vunpack.c.l.b16 %v599
    %v622 = vunpack.c.h.b16 %v599
    %v623 = vunpack.c.l.b16 %v600
    %v624 = vunpack.c.h.b16 %v600
    %v625 = vpack.c.b16 %v611, %v609
    %v626 = vpack.c.b16 %v612, %v610
    %v627 = vpack.c.b16 %v615, %v613
    %v628 = vpack.c.b16 %v616, %v614
    %v629 = vpack.c.b16 %v619, %v617
    %v630 = vpack.c.b16 %v620, %v618
    %v631 = vpack.c.b16 %v623, %v621
    %v632 = vpack.c.b16 %v624, %v622
    %vm641 = vcmask 523264
    %v643 = vsel %vm641, %v592, 0
    %645 = vmatprep.subr.bf16.mxu0 0
    %646 = vmatpush1.bf16.msra.mxu0 0
    %647 = vmatprep.subr.bf16.mxu0 0
    %648 = vmatpush1.bf16.msra.mxu0 0
    %649 = vmatprep.subr.bf16.mxu0 0
    %650 = vmatpush1.bf16.msra.mxu0 0
    %651 = vmatprep.subr.bf16.mxu0 0
    %652 = vmatpush1.bf16.msra.mxu0 0
    %653 = vmatprep.subr.bf16.mxu0 %v632
    %654 = vmatpush1.bf16.msra.mxu0 %v631
    %655 = vmatprep.subr.bf16.mxu0 %v630
    %656 = vmatpush1.bf16.msra.mxu0 %v629
    %657 = vmatprep.subr.bf16.mxu0 %v628
    %658 = vmatpush1.bf16.msra.mxu0 %v627
    %659 = vmatprep.subr.bf16.mxu0 %v626
    %660 = vmatpush1.bf16.msra.mxu0 %v625
    %661 = vmatprep.subr.bf16.mxu0 0
    %662 = vmatpush2.bf16.msra.mxu0 0
    %663 = vmatprep.subr.bf16.mxu0 0
    %664 = vmatpush2.bf16.msra.mxu0 0
    %665 = vmatprep.subr.bf16.mxu0 0
    %666 = vmatpush2.bf16.msra.mxu0 0
    %667 = vmatprep.subr.bf16.mxu0 0
    %668 = vmatpush2.bf16.msra.mxu0 0
    %669 = vmatprep.subr.bf16.mxu0 0
    %670 = vmatpush2.bf16.msra.mxu0 0
    %671 = vmatprep.subr.bf16.mxu0 0
    %672 = vmatpush2.bf16.msra.mxu0 0
    %673 = vmatprep.subr.bf16.mxu0 0
    %674 = vmatpush2.bf16.msra.mxu0 0
    %675 = vmatprep.subr.bf16.mxu0 0
    %676 = vmatpush2.bf16.msra.mxu0 0
    %677 = vmatprep.mubr.bf16.mxu0 0
    %678 = vmatmul.mubr.bf16.gmra.mxu0 %v643
    %v679 = vpop.f32.mrf.mxu0
    %v680 = vadd.f32 0.0, %v679
    %v681 = vpop.f32.mrf.mxu0
    %v682 = vadd.f32 0.0, %v681
    %v683 = vpop.f32.mrf.mxu0
    %v684 = vpop.f32.mrf.mxu0
    %685 = vdwg.mxu0
    %v687 = vlaneseq
    %v688 = vshrl.u32 %v687, 7
    %v689 = vsub.s32 0, %v688
    %v690 = vrot.slane %v573, %v689
    %v691 = vlaneseq
    %v692 = vshrl.u32 %v691, 7
    %v693 = vsub.s32 1, %v692
    %v694 = vrot.slane %v573, %v693
    %v697 = vadd.f32 %v690, %v680
    %v698 = vadd.f32 %v694, %v682
    %v699 = vrot.slane %v554, 7
    %v700 = vrot.slane %v699, 2
    %v701 = vrot.slane %v562, 7
    %v702 = vsel %vm219, %v700, %v701
    %v703 = vrot.slane %v701, 2
    %v704 = vrot.slane %v561, 7
    %v705 = vsel %vm219, %v703, %v704
    %v706 = vrot.slane %v563, 7
    %v707 = vrot.slane %v706, 2
    %v708 = vrot.slane %v570, 7
    %v709 = vsel %vm219, %v707, %v708
    %v710 = vrot.slane %v708, 2
    %v711 = vrot.slane %v571, 7
    %v712 = vsel %vm219, %v710, %v711
    %v713 = vcombine.low %v702, %v705
    %v714 = vcombine.low %v709, %v712
    %v716 = vunpack.c.l.s4 1983009808
    %v717 = vunpack.c.0.s8 %v716
    %v718 = vlaneseq
    %v719 = vshrl.u32 %v718, 7
    %v720 = vsub.s32 %v717, %v719
    %v721 = vrot.slane %v713, %v720
    %v723 = vunpack.c.l.s4 1983009808
    %v724 = vunpack.c.0.s8 %v723
    %v725 = vlaneseq
    %v726 = vshrl.u32 %v725, 7
    %v727 = vsub.s32 %v724, %v726
    %v728 = vrot.slane %v714, %v727
    %v729 = vcombine.low %v721, %v728
    %v731 = vpack.c.bf16 %v729, %v729
    %s732 = scalar_lea.vmem [#allocation5], 64
    %v733 = vld [vmem:[%s732] sm:$0xff]
    %v734 = vld [vmem:[%s732 + $0x8] sm:$0xff]
    %v735 = vld [vmem:[%s732 + $0x10] sm:$0xff]
    %v736 = vld [vmem:[%s732 + $0x18] sm:$0xff]
    %v737 = vld [vmem:[%s732 + $0x20] sm:$0xff]
    %v738 = vld [vmem:[%s732 + $0x28] sm:$0xff]
    %v739 = vld [vmem:[%s732 + $0x30] sm:$0xff]
    %v740 = vld [vmem:[%s732 + $0x38] sm:$0xff]
    %v749 = vunpack.c.l.b16 %v733
    %v750 = vunpack.c.h.b16 %v733
    %v751 = vunpack.c.l.b16 %v734
    %v752 = vunpack.c.h.b16 %v734
    %v753 = vunpack.c.l.b16 %v735
    %v754 = vunpack.c.h.b16 %v735
    %v755 = vunpack.c.l.b16 %v736
    %v756 = vunpack.c.h.b16 %v736
    %v757 = vunpack.c.l.b16 %v737
    %v758 = vunpack.c.h.b16 %v737
    %v759 = vunpack.c.l.b16 %v738
    %v760 = vunpack.c.h.b16 %v738
    %v761 = vunpack.c.l.b16 %v739
    %v762 = vunpack.c.h.b16 %v739
    %v763 = vunpack.c.l.b16 %v740
    %v764 = vunpack.c.h.b16 %v740
    %v765 = vpack.c.b16 %v751, %v749
    %v766 = vpack.c.b16 %v752, %v750
    %v767 = vpack.c.b16 %v755, %v753
    %v768 = vpack.c.b16 %v756, %v754
    %v769 = vpack.c.b16 %v759, %v757
    %v770 = vpack.c.b16 %v760, %v758
    %v771 = vpack.c.b16 %v763, %v761
    %v772 = vpack.c.b16 %v764, %v762
    %v782 = vsel %vm641, %v731, 0
    %784 = vmatprep.subr.bf16.mxu0 0
    %785 = vmatpush1.bf16.msra.mxu0 0
    %786 = vmatprep.subr.bf16.mxu0 0
    %787 = vmatpush1.bf16.msra.mxu0 0
    %788 = vmatprep.subr.bf16.mxu0 0
    %789 = vmatpush1.bf16.msra.mxu0 0
    %790 = vmatprep.subr.bf16.mxu0 0
    %791 = vmatpush1.bf16.msra.mxu0 0
    %792 = vmatprep.subr.bf16.mxu0 %v772
    %793 = vmatpush1.bf16.msra.mxu0 %v771
    %794 = vmatprep.subr.bf16.mxu0 %v770
    %795 = vmatpush1.bf16.msra.mxu0 %v769
    %796 = vmatprep.subr.bf16.mxu0 %v768
    %797 = vmatpush1.bf16.msra.mxu0 %v767
    %798 = vmatprep.subr.bf16.mxu0 %v766
    %799 = vmatpush1.bf16.msra.mxu0 %v765
    %800 = vmatprep.subr.bf16.mxu0 0
    %801 = vmatpush2.bf16.msra.mxu0 0
    %802 = vmatprep.subr.bf16.mxu0 0
    %803 = vmatpush2.bf16.msra.mxu0 0
    %804 = vmatprep.subr.bf16.mxu0 0
    %805 = vmatpush2.bf16.msra.mxu0 0
    %806 = vmatprep.subr.bf16.mxu0 0
    %807 = vmatpush2.bf16.msra.mxu0 0
    %808 = vmatprep.subr.bf16.mxu0 0
    %809 = vmatpush2.bf16.msra.mxu0 0
    %810 = vmatprep.subr.bf16.mxu0 0
    %811 = vmatpush2.bf16.msra.mxu0 0
    %812 = vmatprep.subr.bf16.mxu0 0
    %813 = vmatpush2.bf16.msra.mxu0 0
    %814 = vmatprep.subr.bf16.mxu0 0
    %815 = vmatpush2.bf16.msra.mxu0 0
    %816 = vmatprep.mubr.bf16.mxu0 0
    %817 = vmatmul.mubr.bf16.gmra.mxu0 %v782
    %v818 = vpop.f32.mrf.mxu0
    %v819 = vadd.f32 0.0, %v818
    %v820 = vpop.f32.mrf.mxu0
    %v821 = vadd.f32 0.0, %v820
    %v822 = vpop.f32.mrf.mxu0
    %v823 = vpop.f32.mrf.mxu0
    %824 = vdwg.mxu0
    %v825 = vadd.f32 %v697, %v819
    %v826 = vadd.f32 %v698, %v821
    %v827 = vcombine.low %v562, %v561
    %v828 = vcombine.low %v570, %v571
    %v830 = vunpack.c.l.s4 1983009808
    %v831 = vunpack.c.0.s8 %v830
    %v832 = vlaneseq
    %v833 = vshrl.u32 %v832, 7
    %v834 = vsub.s32 %v831, %v833
    %v835 = vrot.slane %v827, %v834
    %v837 = vunpack.c.l.s4 1983009808
    %v838 = vunpack.c.0.s8 %v837
    %v839 = vlaneseq
    %v840 = vshrl.u32 %v839, 7
    %v841 = vsub.s32 %v838, %v840
    %v842 = vrot.slane %v828, %v841
    %v843 = vcombine.low %v835, %v842
    %v845 = vpack.c.bf16 %v843, %v843
    %s846 = scalar_lea.vmem [#allocation5], 128
    %v847 = vld [vmem:[%s846] sm:$0xff]
    %v848 = vld [vmem:[%s846 + $0x8] sm:$0xff]
    %v849 = vld [vmem:[%s846 + $0x10] sm:$0xff]
    %v850 = vld [vmem:[%s846 + $0x18] sm:$0xff]
    %v851 = vld [vmem:[%s846 + $0x20] sm:$0xff]
    %v852 = vld [vmem:[%s846 + $0x28] sm:$0xff]
    %v853 = vld [vmem:[%s846 + $0x30] sm:$0xff]
    %v854 = vld [vmem:[%s846 + $0x38] sm:$0xff]
    %v863 = vunpack.c.l.b16 %v847
    %v864 = vunpack.c.h.b16 %v847
    %v865 = vunpack.c.l.b16 %v848
    %v866 = vunpack.c.h.b16 %v848
    %v867 = vunpack.c.l.b16 %v849
    %v868 = vunpack.c.h.b16 %v849
    %v869 = vunpack.c.l.b16 %v850
    %v870 = vunpack.c.h.b16 %v850
    %v871 = vunpack.c.l.b16 %v851
    %v872 = vunpack.c.h.b16 %v851
    %v873 = vunpack.c.l.b16 %v852
    %v874 = vunpack.c.h.b16 %v852
    %v875 = vunpack.c.l.b16 %v853
    %v876 = vunpack.c.h.b16 %v853
    %v877 = vunpack.c.l.b16 %v854
    %v878 = vunpack.c.h.b16 %v854
    %v879 = vpack.c.b16 %v865, %v863
    %v880 = vpack.c.b16 %v866, %v864
    %v881 = vpack.c.b16 %v869, %v867
    %v882 = vpack.c.b16 %v870, %v868
    %v883 = vpack.c.b16 %v873, %v871
    %v884 = vpack.c.b16 %v874, %v872
    %v885 = vpack.c.b16 %v877, %v875
    %v886 = vpack.c.b16 %v878, %v876
    %v896 = vsel %vm641, %v845, 0
    %898 = vmatprep.subr.bf16.mxu0 0
    %899 = vmatpush1.bf16.msra.mxu0 0
    %900 = vmatprep.subr.bf16.mxu0 0
    %901 = vmatpush1.bf16.msra.mxu0 0
    %902 = vmatprep.subr.bf16.mxu0 0
    %903 = vmatpush1.bf16.msra.mxu0 0
    %904 = vmatprep.subr.bf16.mxu0 0
    %905 = vmatpush1.bf16.msra.mxu0 0
    %906 = vmatprep.subr.bf16.mxu0 %v886
    %907 = vmatpush1.bf16.msra.mxu0 %v885
    %908 = vmatprep.subr.bf16.mxu0 %v884
    %909 = vmatpush1.bf16.msra.mxu0 %v883
    %910 = vmatprep.subr.bf16.mxu0 %v882
    %911 = vmatpush1.bf16.msra.mxu0 %v881
    %912 = vmatprep.subr.bf16.mxu0 %v880
    %913 = vmatpush1.bf16.msra.mxu0 %v879
    %914 = vmatprep.subr.bf16.mxu0 0
    %915 = vmatpush2.bf16.msra.mxu0 0
    %916 = vmatprep.subr.bf16.mxu0 0
    %917 = vmatpush2.bf16.msra.mxu0 0
    %918 = vmatprep.subr.bf16.mxu0 0
    %919 = vmatpush2.bf16.msra.mxu0 0
    %920 = vmatprep.subr.bf16.mxu0 0
    %921 = vmatpush2.bf16.msra.mxu0 0
    %922 = vmatprep.subr.bf16.mxu0 0
    %923 = vmatpush2.bf16.msra.mxu0 0
    %924 = vmatprep.subr.bf16.mxu0 0
    %925 = vmatpush2.bf16.msra.mxu0 0
    %926 = vmatprep.subr.bf16.mxu0 0
    %927 = vmatpush2.bf16.msra.mxu0 0
    %928 = vmatprep.subr.bf16.mxu0 0
    %929 = vmatpush2.bf16.msra.mxu0 0
    %930 = vmatprep.mubr.bf16.mxu0 0
    %931 = vmatmul.mubr.bf16.gmra.mxu0 %v896
    %v932 = vpop.f32.mrf.mxu0
    %v933 = vadd.f32 0.0, %v932
    %v934 = vpop.f32.mrf.mxu0
    %v935 = vadd.f32 0.0, %v934
    %v936 = vpop.f32.mrf.mxu0
    %v937 = vpop.f32.mrf.mxu0
    %938 = vdwg.mxu0
    %v939 = vadd.f32 %v825, %v933
    %v940 = vadd.f32 %v826, %v935
    %v941 = vxor.u32 %v940, 2147483648
    %v942 = vmul.f32 %v941, 1.442695
    %v943 = vpow.pop %v942
    %v944 = vadd.f32 %v943, 1.0
    %v945 = vrcp.pop %v944
    %v946 = vmul.f32 1.0, %v945
    %v947 = vmul.f32 %v939, %v946
    %v948 = vld [vmem:[%s7 + $0x3] ss:$0 sm:$0xff]
    %v949 = vld [vmem:[%s7 + $0x4] ss:$0 sm:$0xff]
    %950 = vadd.xlane.f32.xlu0 %v947
    %v951 = vpop.xlane.xlu0 %950
    %v952 = vrcp.pop 128.0
    %v953 = vmul.f32 %v951, %v952
    %v954 = vsub.f32 %v947, %v953
    %v955 = vmul.f32 %v954, %v954
    %956 = vadd.xlane.f32.xlu0 %v955
    %v957 = vpop.xlane.xlu0 %956
    %v958 = vmul.f32 %v957, %v952
    %v959 = vadd.f32 %v958, 1e-05
    %v960 = vrsqrt.pop %v959
    %v961 = vmul.f32 %v954, %v960
    %v962 = vmul.f32 %v961, %v948
    %v963 = vadd.f32 %v962, %v949
    %v965 = vcombine.high %v963, %v963
    %s967 = scalar_lea.vmem %s7, 5
    %v968 = vld [vmem:[%s967] ss:$8 sm:$0x3]
    %v969 = vpack.c.bf16 %v963, %v963
    %v970 = vpack.c.bf16 %v965, %v965
    %v971 = vld [vmem:[#allocation7] sm:$0xff]
    %v972 = vld [vmem:[#allocation7 + $0x8] sm:$0xff]
    %v973 = vld [vmem:[#allocation7 + $0x10] sm:$0xff]
    %v974 = vld [vmem:[#allocation7 + $0x18] sm:$0xff]
    %v975 = vld [vmem:[#allocation7 + $0x20] sm:$0xff]
    %v976 = vld [vmem:[#allocation7 + $0x28] sm:$0xff]
    %v977 = vld [vmem:[#allocation7 + $0x30] sm:$0xff]
    %v978 = vld [vmem:[#allocation7 + $0x38] sm:$0xff]
    %v979 = vld [vmem:[#allocation7 + $0x40] sm:$0xff]
    %v980 = vld [vmem:[#allocation7 + $0x48] sm:$0xff]
    %v981 = vld [vmem:[#allocation7 + $0x50] sm:$0xff]
    %v982 = vld [vmem:[#allocation7 + $0x58] sm:$0xff]
    %v983 = vld [vmem:[#allocation7 + $0x60] sm:$0xff]
    %v984 = vld [vmem:[#allocation7 + $0x68] sm:$0xff]
    %v985 = vld [vmem:[#allocation7 + $0x70] sm:$0xff]
    %v986 = vld [vmem:[#allocation7 + $0x78] sm:$0xff]
    %v989 = vunpack.c.l.b16 %v969
    %v990 = vunpack.c.l.b16 %v970
    %v991 = vrot.slane %v990, 7
    %vm992 = vcmask 1041409
    %v993 = vsel %vm992, %v991, %v989
    %v994 = vpack.c.b16 %v993, %v993
    %v1012 = vunpack.c.l.b16 %v971
    %v1013 = vunpack.c.h.b16 %v971
    %v1014 = vunpack.c.l.b16 %v972
    %v1015 = vunpack.c.h.b16 %v972
    %v1016 = vunpack.c.l.b16 %v973
    %v1017 = vunpack.c.h.b16 %v973
    %v1018 = vunpack.c.l.b16 %v974
    %v1019 = vunpack.c.h.b16 %v974
    %v1020 = vunpack.c.l.b16 %v975
    %v1021 = vunpack.c.h.b16 %v975
    %v1022 = vunpack.c.l.b16 %v976
    %v1023 = vunpack.c.h.b16 %v976
    %v1024 = vunpack.c.l.b16 %v977
    %v1025 = vunpack.c.h.b16 %v977
    %v1026 = vunpack.c.l.b16 %v978
    %v1027 = vunpack.c.h.b16 %v978
    %v1028 = vunpack.c.l.b16 %v979
    %v1029 = vunpack.c.h.b16 %v979
    %v1030 = vunpack.c.l.b16 %v980
    %v1031 = vunpack.c.h.b16 %v980
    %v1032 = vunpack.c.l.b16 %v981
    %v1033 = vunpack.c.h.b16 %v981
    %v1034 = vunpack.c.l.b16 %v982
    %v1035 = vunpack.c.h.b16 %v982
    %v1036 = vunpack.c.l.b16 %v983
    %v1037 = vunpack.c.h.b16 %v983
    %v1038 = vunpack.c.l.b16 %v984
    %v1039 = vunpack.c.h.b16 %v984
    %v1040 = vunpack.c.l.b16 %v985
    %v1041 = vunpack.c.h.b16 %v985
    %v1042 = vunpack.c.l.b16 %v986
    %v1043 = vunpack.c.h.b16 %v986
    %v1044 = vpack.c.b16 %v1014, %v1012
    %v1045 = vpack.c.b16 %v1015, %v1013
    %v1046 = vpack.c.b16 %v1018, %v1016
    %v1047 = vpack.c.b16 %v1019, %v1017
    %v1048 = vpack.c.b16 %v1022, %v1020
    %v1049 = vpack.c.b16 %v1023, %v1021
    %v1050 = vpack.c.b16 %v1026, %v1024
    %v1051 = vpack.c.b16 %v1027, %v1025
    %v1052 = vpack.c.b16 %v1030, %v1028
    %v1053 = vpack.c.b16 %v1031, %v1029
    %v1054 = vpack.c.b16 %v1034, %v1032
    %v1055 = vpack.c.b16 %v1035, %v1033
    %v1056 = vpack.c.b16 %v1038, %v1036
    %v1057 = vpack.c.b16 %v1039, %v1037
    %v1058 = vpack.c.b16 %v1042, %v1040
    %v1059 = vpack.c.b16 %v1043, %v1041
    %1076 = vmatprep.subr.bf16.mxu0 %v1059
    %1077 = vmatpush1.bf16.msra.mxu0 %v1058
    %1078 = vmatprep.subr.bf16.mxu0 %v1057
    %1079 = vmatpush1.bf16.msra.mxu0 %v1056
    %1080 = vmatprep.subr.bf16.mxu0 %v1055
    %1081 = vmatpush1.bf16.msra.mxu0 %v1054
    %1082 = vmatprep.subr.bf16.mxu0 %v1053
    %1083 = vmatpush1.bf16.msra.mxu0 %v1052
    %1084 = vmatprep.subr.bf16.mxu0 %v1051
    %1085 = vmatpush1.bf16.msra.mxu0 %v1050
    %1086 = vmatprep.subr.bf16.mxu0 %v1049
    %1087 = vmatpush1.bf16.msra.mxu0 %v1048
    %1088 = vmatprep.subr.bf16.mxu0 %v1047
    %1089 = vmatpush1.bf16.msra.mxu0 %v1046
    %1090 = vmatprep.subr.bf16.mxu0 %v1045
    %1091 = vmatpush1.bf16.msra.mxu0 %v1044
    %1092 = vmatprep.subr.bf16.mxu0 0
    %1093 = vmatpush2.bf16.msra.mxu0 0
    %1094 = vmatprep.subr.bf16.mxu0 0
    %1095 = vmatpush2.bf16.msra.mxu0 0
    %1096 = vmatprep.subr.bf16.mxu0 0
    %1097 = vmatpush2.bf16.msra.mxu0 0
    %1098 = vmatprep.subr.bf16.mxu0 0
    %1099 = vmatpush2.bf16.msra.mxu0 0
    %1100 = vmatprep.subr.bf16.mxu0 0
    %1101 = vmatpush2.bf16.msra.mxu0 0
    %1102 = vmatprep.subr.bf16.mxu0 0
    %1103 = vmatpush2.bf16.msra.mxu0 0
    %1104 = vmatprep.subr.bf16.mxu0 0
    %1105 = vmatpush2.bf16.msra.mxu0 0
    %1106 = vmatprep.subr.bf16.mxu0 0
    %1107 = vmatpush2.bf16.msra.mxu0 0
    %1108 = vmatprep.mubr.bf16.mxu0 0
    %1109 = vmatmul.mubr.bf16.gmra.mxu0 %v994
    %v1110 = vpop.f32.mrf.mxu0
    %v1111 = vadd.f32 0.0, %v1110
    %v1112 = vpop.f32.mrf.mxu0
    %v1113 = vadd.f32 0.0, %v1112
    %v1114 = vpop.f32.mrf.mxu0
    %v1115 = vpop.f32.mrf.mxu0
    %1116 = vdwg.mxu0
    %v1118 = vlaneseq
    %v1119 = vshrl.u32 %v1118, 7
    %v1120 = vsub.s32 0, %v1119
    %v1121 = vrot.slane %v968, %v1120
    %v1122 = vlaneseq
    %v1123 = vshrl.u32 %v1122, 7
    %v1124 = vsub.s32 1, %v1123
    %v1125 = vrot.slane %v968, %v1124
    %v1128 = vadd.f32 %v1121, %v1111
    %v1129 = vadd.f32 %v1125, %v1113
    %s1130 = scalar_lea.vmem [#allocation7], 128
    %v1131 = vld [vmem:[%s1130] sm:$0xff]
    %v1132 = vld [vmem:[%s1130 + $0x8] sm:$0xff]
    %v1133 = vld [vmem:[%s1130 + $0x10] sm:$0xff]
    %v1134 = vld [vmem:[%s1130 + $0x18] sm:$0xff]
    %v1135 = vld [vmem:[%s1130 + $0x20] sm:$0xff]
    %v1136 = vld [vmem:[%s1130 + $0x28] sm:$0xff]
    %v1137 = vld [vmem:[%s1130 + $0x30] sm:$0xff]
    %v1138 = vld [vmem:[%s1130 + $0x38] sm:$0xff]
    %v1139 = vld [vmem:[%s1130 + $0x40] sm:$0xff]
    %v1140 = vld [vmem:[%s1130 + $0x48] sm:$0xff]
    %v1141 = vld [vmem:[%s1130 + $0x50] sm:$0xff]
    %v1142 = vld [vmem:[%s1130 + $0x58] sm:$0xff]
    %v1143 = vld [vmem:[%s1130 + $0x60] sm:$0xff]
    %v1144 = vld [vmem:[%s1130 + $0x68] sm:$0xff]
    %v1145 = vld [vmem:[%s1130 + $0x70] sm:$0xff]
    %v1146 = vld [vmem:[%s1130 + $0x78] sm:$0xff]
    %v1147 = vrot.slane %v989, 1
    %v1148 = vsel %vm992, %v990, %v1147
    %v1149 = vpack.c.b16 %v1148, %v1148
    %v1167 = vunpack.c.l.b16 %v1131
    %v1168 = vunpack.c.h.b16 %v1131
    %v1169 = vunpack.c.l.b16 %v1132
    %v1170 = vunpack.c.h.b16 %v1132
    %v1171 = vunpack.c.l.b16 %v1133
    %v1172 = vunpack.c.h.b16 %v1133
    %v1173 = vunpack.c.l.b16 %v1134
    %v1174 = vunpack.c.h.b16 %v1134
    %v1175 = vunpack.c.l.b16 %v1135
    %v1176 = vunpack.c.h.b16 %v1135
    %v1177 = vunpack.c.l.b16 %v1136
    %v1178 = vunpack.c.h.b16 %v1136
    %v1179 = vunpack.c.l.b16 %v1137
    %v1180 = vunpack.c.h.b16 %v1137
    %v1181 = vunpack.c.l.b16 %v1138
    %v1182 = vunpack.c.h.b16 %v1138
    %v1183 = vunpack.c.l.b16 %v1139
    %v1184 = vunpack.c.h.b16 %v1139
    %v1185 = vunpack.c.l.b16 %v1140
    %v1186 = vunpack.c.h.b16 %v1140
    %v1187 = vunpack.c.l.b16 %v1141
    %v1188 = vunpack.c.h.b16 %v1141
    %v1189 = vunpack.c.l.b16 %v1142
    %v1190 = vunpack.c.h.b16 %v1142
    %v1191 = vunpack.c.l.b16 %v1143
    %v1192 = vunpack.c.h.b16 %v1143
    %v1193 = vunpack.c.l.b16 %v1144
    %v1194 = vunpack.c.h.b16 %v1144
    %v1195 = vunpack.c.l.b16 %v1145
    %v1196 = vunpack.c.h.b16 %v1145
    %v1197 = vunpack.c.l.b16 %v1146
    %v1198 = vunpack.c.h.b16 %v1146
    %v1199 = vpack.c.b16 %v1169, %v1167
    %v1200 = vpack.c.b16 %v1170, %v1168
    %v1201 = vpack.c.b16 %v1173, %v1171
    %v1202 = vpack.c.b16 %v1174, %v1172
    %v1203 = vpack.c.b16 %v1177, %v1175
    %v1204 = vpack.c.b16 %v1178, %v1176
    %v1205 = vpack.c.b16 %v1181, %v1179
    %v1206 = vpack.c.b16 %v1182, %v1180
    %v1207 = vpack.c.b16 %v1185, %v1183
    %v1208 = vpack.c.b16 %v1186, %v1184
    %v1209 = vpack.c.b16 %v1189, %v1187
    %v1210 = vpack.c.b16 %v1190, %v1188
    %v1211 = vpack.c.b16 %v1193, %v1191
    %v1212 = vpack.c.b16 %v1194, %v1192
    %v1213 = vpack.c.b16 %v1197, %v1195
    %v1214 = vpack.c.b16 %v1198, %v1196
    %1231 = vmatprep.subr.bf16.mxu0 %v1214
    %1232 = vmatpush1.bf16.msra.mxu0 %v1213
    %1233 = vmatprep.subr.bf16.mxu0 %v1212
    %1234 = vmatpush1.bf16.msra.mxu0 %v1211
    %1235 = vmatprep.subr.bf16.mxu0 %v1210
    %1236 = vmatpush1.bf16.msra.mxu0 %v1209
    %1237 = vmatprep.subr.bf16.mxu0 %v1208
    %1238 = vmatpush1.bf16.msra.mxu0 %v1207
    %1239 = vmatprep.subr.bf16.mxu0 %v1206
    %1240 = vmatpush1.bf16.msra.mxu0 %v1205
    %1241 = vmatprep.subr.bf16.mxu0 %v1204
    %1242 = vmatpush1.bf16.msra.mxu0 %v1203
    %1243 = vmatprep.subr.bf16.mxu0 %v1202
    %1244 = vmatpush1.bf16.msra.mxu0 %v1201
    %1245 = vmatprep.subr.bf16.mxu0 %v1200
    %1246 = vmatpush1.bf16.msra.mxu0 %v1199
    %1247 = vmatprep.subr.bf16.mxu0 0
    %1248 = vmatpush2.bf16.msra.mxu0 0
    %1249 = vmatprep.subr.bf16.mxu0 0
    %1250 = vmatpush2.bf16.msra.mxu0 0
    %1251 = vmatprep.subr.bf16.mxu0 0
    %1252 = vmatpush2.bf16.msra.mxu0 0
    %1253 = vmatprep.subr.bf16.mxu0 0
    %1254 = vmatpush2.bf16.msra.mxu0 0
    %1255 = vmatprep.subr.bf16.mxu0 0
    %1256 = vmatpush2.bf16.msra.mxu0 0
    %1257 = vmatprep.subr.bf16.mxu0 0
    %1258 = vmatpush2.bf16.msra.mxu0 0
    %1259 = vmatprep.subr.bf16.mxu0 0
    %1260 = vmatpush2.bf16.msra.mxu0 0
    %1261 = vmatprep.subr.bf16.mxu0 0
    %1262 = vmatpush2.bf16.msra.mxu0 0
    %1263 = vmatprep.mubr.bf16.mxu0 0
    %1264 = vmatmul.mubr.bf16.gmra.mxu0 %v1149
    %v1265 = vpop.f32.mrf.mxu0
    %v1266 = vadd.f32 0.0, %v1265
    %v1267 = vpop.f32.mrf.mxu0
    %v1268 = vadd.f32 0.0, %v1267
    %v1269 = vpop.f32.mrf.mxu0
    %v1270 = vpop.f32.mrf.mxu0
    %1271 = vdwg.mxu0
    %v1272 = vadd.f32 %v1128, %v1266
    %v1273 = vadd.f32 %v1129, %v1268
    %s1274 = scalar_lea.vmem [#allocation7], 256
    %v1275 = vld [vmem:[%s1274] sm:$0xff]
    %v1276 = vld [vmem:[%s1274 + $0x8] sm:$0xff]
    %v1277 = vld [vmem:[%s1274 + $0x10] sm:$0xff]
    %v1278 = vld [vmem:[%s1274 + $0x18] sm:$0xff]
    %v1279 = vld [vmem:[%s1274 + $0x20] sm:$0xff]
    %v1280 = vld [vmem:[%s1274 + $0x28] sm:$0xff]
    %v1281 = vld [vmem:[%s1274 + $0x30] sm:$0xff]
    %v1282 = vld [vmem:[%s1274 + $0x38] sm:$0xff]
    %v1283 = vld [vmem:[%s1274 + $0x40] sm:$0xff]
    %v1284 = vld [vmem:[%s1274 + $0x48] sm:$0xff]
    %v1285 = vld [vmem:[%s1274 + $0x50] sm:$0xff]
    %v1286 = vld [vmem:[%s1274 + $0x58] sm:$0xff]
    %v1287 = vld [vmem:[%s1274 + $0x60] sm:$0xff]
    %v1288 = vld [vmem:[%s1274 + $0x68] sm:$0xff]
    %v1289 = vld [vmem:[%s1274 + $0x70] sm:$0xff]
    %v1290 = vld [vmem:[%s1274 + $0x78] sm:$0xff]
    %v1291 = vrot.slane %v989, 2
    %v1292 = vrot.slane %v990, 1
    %v1293 = vsel %vm992, %v1292, %v1291
    %v1294 = vpack.c.b16 %v1293, %v1293
    %v1312 = vunpack.c.l.b16 %v1275
    %v1313 = vunpack.c.h.b16 %v1275
    %v1314 = vunpack.c.l.b16 %v1276
    %v1315 = vunpack.c.h.b16 %v1276
    %v1316 = vunpack.c.l.b16 %v1277
    %v1317 = vunpack.c.h.b16 %v1277
    %v1318 = vunpack.c.l.b16 %v1278
    %v1319 = vunpack.c.h.b16 %v1278
    %v1320 = vunpack.c.l.b16 %v1279
    %v1321 = vunpack.c.h.b16 %v1279
    %v1322 = vunpack.c.l.b16 %v1280
    %v1323 = vunpack.c.h.b16 %v1280
    %v1324 = vunpack.c.l.b16 %v1281
    %v1325 = vunpack.c.h.b16 %v1281
    %v1326 = vunpack.c.l.b16 %v1282
    %v1327 = vunpack.c.h.b16 %v1282
    %v1328 = vunpack.c.l.b16 %v1283
    %v1329 = vunpack.c.h.b16 %v1283
    %v1330 = vunpack.c.l.b16 %v1284
    %v1331 = vunpack.c.h.b16 %v1284
    %v1332 = vunpack.c.l.b16 %v1285
    %v1333 = vunpack.c.h.b16 %v1285
    %v1334 = vunpack.c.l.b16 %v1286
    %v1335 = vunpack.c.h.b16 %v1286
    %v1336 = vunpack.c.l.b16 %v1287
    %v1337 = vunpack.c.h.b16 %v1287
    %v1338 = vunpack.c.l.b16 %v1288
    %v1339 = vunpack.c.h.b16 %v1288
    %v1340 = vunpack.c.l.b16 %v1289
    %v1341 = vunpack.c.h.b16 %v1289
    %v1342 = vunpack.c.l.b16 %v1290
    %v1343 = vunpack.c.h.b16 %v1290
    %v1344 = vpack.c.b16 %v1314, %v1312
    %v1345 = vpack.c.b16 %v1315, %v1313
    %v1346 = vpack.c.b16 %v1318, %v1316
    %v1347 = vpack.c.b16 %v1319, %v1317
    %v1348 = vpack.c.b16 %v1322, %v1320
    %v1349 = vpack.c.b16 %v1323, %v1321
    %v1350 = vpack.c.b16 %v1326, %v1324
    %v1351 = vpack.c.b16 %v1327, %v1325
    %v1352 = vpack.c.b16 %v1330, %v1328
    %v1353 = vpack.c.b16 %v1331, %v1329
    %v1354 = vpack.c.b16 %v1334, %v1332
    %v1355 = vpack.c.b16 %v1335, %v1333
    %v1356 = vpack.c.b16 %v1338, %v1336
    %v1357 = vpack.c.b16 %v1339, %v1337
    %v1358 = vpack.c.b16 %v1342, %v1340
    %v1359 = vpack.c.b16 %v1343, %v1341
    %1376 = vmatprep.subr.bf16.mxu0 %v1359
    %1377 = vmatpush1.bf16.msra.mxu0 %v1358
    %1378 = vmatprep.subr.bf16.mxu0 %v1357
    %1379 = vmatpush1.bf16.msra.mxu0 %v1356
    %1380 = vmatprep.subr.bf16.mxu0 %v1355
    %1381 = vmatpush1.bf16.msra.mxu0 %v1354
    %1382 = vmatprep.subr.bf16.mxu0 %v1353
    %1383 = vmatpush1.bf16.msra.mxu0 %v1352
    %1384 = vmatprep.subr.bf16.mxu0 %v1351
    %1385 = vmatpush1.bf16.msra.mxu0 %v1350
    %1386 = vmatprep.subr.bf16.mxu0 %v1349
    %1387 = vmatpush1.bf16.msra.mxu0 %v1348
    %1388 = vmatprep.subr.bf16.mxu0 %v1347
    %1389 = vmatpush1.bf16.msra.mxu0 %v1346
    %1390 = vmatprep.subr.bf16.mxu0 %v1345
    %1391 = vmatpush1.bf16.msra.mxu0 %v1344
    %1392 = vmatprep.subr.bf16.mxu0 0
    %1393 = vmatpush2.bf16.msra.mxu0 0
    %1394 = vmatprep.subr.bf16.mxu0 0
    %1395 = vmatpush2.bf16.msra.mxu0 0
    %1396 = vmatprep.subr.bf16.mxu0 0
    %1397 = vmatpush2.bf16.msra.mxu0 0
    %1398 = vmatprep.subr.bf16.mxu0 0
    %1399 = vmatpush2.bf16.msra.mxu0 0
    %1400 = vmatprep.subr.bf16.mxu0 0
    %1401 = vmatpush2.bf16.msra.mxu0 0
    %1402 = vmatprep.subr.bf16.mxu0 0
    %1403 = vmatpush2.bf16.msra.mxu0 0
    %1404 = vmatprep.subr.bf16.mxu0 0
    %1405 = vmatpush2.bf16.msra.mxu0 0
    %1406 = vmatprep.subr.bf16.mxu0 0
    %1407 = vmatpush2.bf16.msra.mxu0 0
    %1408 = vmatprep.mubr.bf16.mxu0 0
    %1409 = vmatmul.mubr.bf16.gmra.mxu0 %v1294
    %v1410 = vpop.f32.mrf.mxu0
    %v1411 = vadd.f32 0.0, %v1410
    %v1412 = vpop.f32.mrf.mxu0
    %v1413 = vadd.f32 0.0, %v1412
    %v1414 = vpop.f32.mrf.mxu0
    %v1415 = vpop.f32.mrf.mxu0
    %1416 = vdwg.mxu0
    %v1417 = vadd.f32 %v1272, %v1411
    %v1418 = vadd.f32 %v1273, %v1413
    %s1419 = scalar_lea.vmem [#allocation7], 384
    %v1420 = vld [vmem:[%s1419] sm:$0xff]
    %v1421 = vld [vmem:[%s1419 + $0x8] sm:$0xff]
    %v1422 = vld [vmem:[%s1419 + $0x10] sm:$0xff]
    %v1423 = vld [vmem:[%s1419 + $0x18] sm:$0xff]
    %v1424 = vld [vmem:[%s1419 + $0x20] sm:$0xff]
    %v1425 = vld [vmem:[%s1419 + $0x28] sm:$0xff]
    %v1426 = vld [vmem:[%s1419 + $0x30] sm:$0xff]
    %v1427 = vld [vmem:[%s1419 + $0x38] sm:$0xff]
    %v1428 = vld [vmem:[%s1419 + $0x40] sm:$0xff]
    %v1429 = vld [vmem:[%s1419 + $0x48] sm:$0xff]
    %v1430 = vld [vmem:[%s1419 + $0x50] sm:$0xff]
    %v1431 = vld [vmem:[%s1419 + $0x58] sm:$0xff]
    %v1432 = vld [vmem:[%s1419 + $0x60] sm:$0xff]
    %v1433 = vld [vmem:[%s1419 + $0x68] sm:$0xff]
    %v1434 = vld [vmem:[%s1419 + $0x70] sm:$0xff]
    %v1435 = vld [vmem:[%s1419 + $0x78] sm:$0xff]
    %v1436 = vrot.slane %v989, 3
    %v1437 = vrot.slane %v990, 2
    %v1438 = vsel %vm992, %v1437, %v1436
    %v1439 = vpack.c.b16 %v1438, %v1438
    %v1457 = vunpack.c.l.b16 %v1420
    %v1458 = vunpack.c.h.b16 %v1420
    %v1459 = vunpack.c.l.b16 %v1421
    %v1460 = vunpack.c.h.b16 %v1421
    %v1461 = vunpack.c.l.b16 %v1422
    %v1462 = vunpack.c.h.b16 %v1422
    %v1463 = vunpack.c.l.b16 %v1423
    %v1464 = vunpack.c.h.b16 %v1423
    %v1465 = vunpack.c.l.b16 %v1424
    %v1466 = vunpack.c.h.b16 %v1424
    %v1467 = vunpack.c.l.b16 %v1425
    %v1468 = vunpack.c.h.b16 %v1425
    %v1469 = vunpack.c.l.b16 %v1426
    %v1470 = vunpack.c.h.b16 %v1426
    %v1471 = vunpack.c.l.b16 %v1427
    %v1472 = vunpack.c.h.b16 %v1427
    %v1473 = vunpack.c.l.b16 %v1428
    %v1474 = vunpack.c.h.b16 %v1428
    %v1475 = vunpack.c.l.b16 %v1429
    %v1476 = vunpack.c.h.b16 %v1429
    %v1477 = vunpack.c.l.b16 %v1430
    %v1478 = vunpack.c.h.b16 %v1430
    %v1479 = vunpack.c.l.b16 %v1431
    %v1480 = vunpack.c.h.b16 %v1431
    %v1481 = vunpack.c.l.b16 %v1432
    %v1482 = vunpack.c.h.b16 %v1432
    %v1483 = vunpack.c.l.b16 %v1433
    %v1484 = vunpack.c.h.b16 %v1433
    %v1485 = vunpack.c.l.b16 %v1434
    %v1486 = vunpack.c.h.b16 %v1434
    %v1487 = vunpack.c.l.b16 %v1435
    %v1488 = vunpack.c.h.b16 %v1435
    %v1489 = vpack.c.b16 %v1459, %v1457
    %v1490 = vpack.c.b16 %v1460, %v1458
    %v1491 = vpack.c.b16 %v1463, %v1461
    %v1492 = vpack.c.b16 %v1464, %v1462
    %v1493 = vpack.c.b16 %v1467, %v1465
    %v1494 = vpack.c.b16 %v1468, %v1466
    %v1495 = vpack.c.b16 %v1471, %v1469
    %v1496 = vpack.c.b16 %v1472, %v1470
    %v1497 = vpack.c.b16 %v1475, %v1473
    %v1498 = vpack.c.b16 %v1476, %v1474
    %v1499 = vpack.c.b16 %v1479, %v1477
    %v1500 = vpack.c.b16 %v1480, %v1478
    %v1501 = vpack.c.b16 %v1483, %v1481
    %v1502 = vpack.c.b16 %v1484, %v1482
    %v1503 = vpack.c.b16 %v1487, %v1485
    %v1504 = vpack.c.b16 %v1488, %v1486
    %1521 = vmatprep.subr.bf16.mxu0 %v1504
    %1522 = vmatpush1.bf16.msra.mxu0 %v1503
    %1523 = vmatprep.subr.bf16.mxu0 %v1502
    %1524 = vmatpush1.bf16.msra.mxu0 %v1501
    %1525 = vmatprep.subr.bf16.mxu0 %v1500
    %1526 = vmatpush1.bf16.msra.mxu0 %v1499
    %1527 = vmatprep.subr.bf16.mxu0 %v1498
    %1528 = vmatpush1.bf16.msra.mxu0 %v1497
    %1529 = vmatprep.subr.bf16.mxu0 %v1496
    %1530 = vmatpush1.bf16.msra.mxu0 %v1495
    %1531 = vmatprep.subr.bf16.mxu0 %v1494
    %1532 = vmatpush1.bf16.msra.mxu0 %v1493
    %1533 = vmatprep.subr.bf16.mxu0 %v1492
    %1534 = vmatpush1.bf16.msra.mxu0 %v1491
    %1535 = vmatprep.subr.bf16.mxu0 %v1490
    %1536 = vmatpush1.bf16.msra.mxu0 %v1489
    %1537 = vmatprep.subr.bf16.mxu0 0
    %1538 = vmatpush2.bf16.msra.mxu0 0
    %1539 = vmatprep.subr.bf16.mxu0 0
    %1540 = vmatpush2.bf16.msra.mxu0 0
    %1541 = vmatprep.subr.bf16.mxu0 0
    %1542 = vmatpush2.bf16.msra.mxu0 0
    %1543 = vmatprep.subr.bf16.mxu0 0
    %1544 = vmatpush2.bf16.msra.mxu0 0
    %1545 = vmatprep.subr.bf16.mxu0 0
    %1546 = vmatpush2.bf16.msra.mxu0 0
    %1547 = vmatprep.subr.bf16.mxu0 0
    %1548 = vmatpush2.bf16.msra.mxu0 0
    %1549 = vmatprep.subr.bf16.mxu0 0
    %1550 = vmatpush2.bf16.msra.mxu0 0
    %1551 = vmatprep.subr.bf16.mxu0 0
    %1552 = vmatpush2.bf16.msra.mxu0 0
    %1553 = vmatprep.mubr.bf16.mxu0 0
    %1554 = vmatmul.mubr.bf16.gmra.mxu0 %v1439
    %v1555 = vpop.f32.mrf.mxu0
    %v1556 = vadd.f32 0.0, %v1555
    %v1557 = vpop.f32.mrf.mxu0
    %v1558 = vadd.f32 0.0, %v1557
    %v1559 = vpop.f32.mrf.mxu0
    %v1560 = vpop.f32.mrf.mxu0
    %1561 = vdwg.mxu0
    %v1562 = vadd.f32 %v1417, %v1556
    %v1563 = vadd.f32 %v1418, %v1558
    %v1564 = vxor.u32 %v1563, 2147483648
    %v1565 = vmul.f32 %v1564, 1.442695
    %v1566 = vpow.pop %v1565
    %v1567 = vadd.f32 %v1566, 1.0
    %v1568 = vrcp.pop %v1567
    %v1569 = vmul.f32 1.0, %v1568
    %v1570 = vmul.f32 %v1562, %v1569
    %v1571 = vld [vmem:[%s7 + $0x6] ss:$0 sm:$0xff]
    %v1572 = vld [vmem:[%s7 + $0x7] ss:$0 sm:$0xff]
    %vm1573 = vcmask 1041408
    %v1574 = vsel %vm1573, %v1570, 0.0
    %1575 = vadd.xlane.f32.xlu0 %v1574
    %v1576 = vpop.xlane.xlu0 %1575
    %v1577 = vmul.f32 %v1576, %v952
    %v1578 = vsub.f32 %v1570, %v1577
    %v1579 = vmul.f32 %v1578, %v1578
    %v1580 = vsel %vm1573, %v1579, 0.0
    %1581 = vadd.xlane.f32.xlu0 %v1580
    %v1582 = vpop.xlane.xlu0 %1581
    %v1583 = vmul.f32 %v1582, %v952
    %v1584 = vadd.f32 %v1583, 1e-05
    %v1585 = vrsqrt.pop %v1584
    %v1586 = vmul.f32 %v1578, %v1585
    %v1587 = vmul.f32 %v1586, %v1571
    %v1588 = vadd.f32 %v1587, %v1572
    %v1589 = vpack.c.bf16 %v1588, %v1588
    %v1590 = vld [vmem:[%s5] sm:$0xf]
    %v1591 = vld [vmem:[%s5 + $0x4] sm:$0xf]
    %v1592 = vld [vmem:[%s5 + $0x8] sm:$0xf]
    %v1593 = vld [vmem:[%s5 + $0xc] sm:$0xf]
    %v1594 = vld [vmem:[%s5 + $0x10] sm:$0xf]
    %v1595 = vld [vmem:[%s5 + $0x14] sm:$0xf]
    %v1596 = vld [vmem:[%s5 + $0x18] sm:$0xf]
    %v1597 = vld [vmem:[%s5 + $0x1c] sm:$0xf]
    %v1598 = vld [vmem:[%s5 + $0x20] sm:$0xf]
    %v1599 = vld [vmem:[%s5 + $0x24] sm:$0xf]
    %v1600 = vld [vmem:[%s5 + $0x28] sm:$0xf]
    %v1601 = vld [vmem:[%s5 + $0x2c] sm:$0xf]
    %v1602 = vld [vmem:[%s5 + $0x30] sm:$0xf]
    %v1603 = vld [vmem:[%s5 + $0x34] sm:$0xf]
    %v1604 = vld [vmem:[%s5 + $0x38] sm:$0xf]
    %v1605 = vld [vmem:[%s5 + $0x3c] sm:$0xf]
    %v1606 = vld [vmem:[%s7 + $0x10] ss:$0 sm:$0xff]
    %v1623 = vunpack.c.l.b16 %v1590
    %v1624 = vunpack.c.l.b16 %v1591
    %v1625 = vunpack.c.l.b16 %v1592
    %v1626 = vunpack.c.l.b16 %v1593
    %v1627 = vunpack.c.l.b16 %v1594
    %v1628 = vunpack.c.l.b16 %v1595
    %v1629 = vunpack.c.l.b16 %v1596
    %v1630 = vunpack.c.l.b16 %v1597
    %v1631 = vunpack.c.l.b16 %v1598
    %v1632 = vunpack.c.l.b16 %v1599
    %v1633 = vunpack.c.l.b16 %v1600
    %v1634 = vunpack.c.l.b16 %v1601
    %v1635 = vunpack.c.l.b16 %v1602
    %v1636 = vunpack.c.l.b16 %v1603
    %v1637 = vunpack.c.l.b16 %v1604
    %v1638 = vunpack.c.l.b16 %v1605
    %v1639 = vpack.c.b16 %v1624, %v1623
    %v1640 = vpack.c.b16 %v1626, %v1625
    %v1641 = vpack.c.b16 %v1628, %v1627
    %v1642 = vpack.c.b16 %v1630, %v1629
    %v1643 = vpack.c.b16 %v1632, %v1631
    %v1644 = vpack.c.b16 %v1634, %v1633
    %v1645 = vpack.c.b16 %v1636, %v1635
    %v1646 = vpack.c.b16 %v1638, %v1637
    %1655 = vmatprep.subr.bf16.mxu0 0
    %1656 = vmatpush1.bf16.msra.mxu0 %v1646
    %1657 = vmatprep.subr.bf16.mxu0 0
    %1658 = vmatpush1.bf16.msra.mxu0 %v1645
    %1659 = vmatprep.subr.bf16.mxu0 0
    %1660 = vmatpush1.bf16.msra.mxu0 %v1644
    %1661 = vmatprep.subr.bf16.mxu0 0
    %1662 = vmatpush1.bf16.msra.mxu0 %v1643
    %1663 = vmatprep.subr.bf16.mxu0 0
    %1664 = vmatpush1.bf16.msra.mxu0 %v1642
    %1665 = vmatprep.subr.bf16.mxu0 0
    %1666 = vmatpush1.bf16.msra.mxu0 %v1641
    %1667 = vmatprep.subr.bf16.mxu0 0
    %1668 = vmatpush1.bf16.msra.mxu0 %v1640
    %1669 = vmatprep.subr.bf16.mxu0 0
    %1670 = vmatpush1.bf16.msra.mxu0 %v1639
    %1671 = vmatprep.subr.bf16.mxu0 0
    %1672 = vmatpush2.bf16.msra.mxu0 0
    %1673 = vmatprep.subr.bf16.mxu0 0
    %1674 = vmatpush2.bf16.msra.mxu0 0
    %1675 = vmatprep.subr.bf16.mxu0 0
    %1676 = vmatpush2.bf16.msra.mxu0 0
    %1677 = vmatprep.subr.bf16.mxu0 0
    %1678 = vmatpush2.bf16.msra.mxu0 0
    %1679 = vmatprep.subr.bf16.mxu0 0
    %1680 = vmatpush2.bf16.msra.mxu0 0
    %1681 = vmatprep.subr.bf16.mxu0 0
    %1682 = vmatpush2.bf16.msra.mxu0 0
    %1683 = vmatprep.subr.bf16.mxu0 0
    %1684 = vmatpush2.bf16.msra.mxu0 0
    %1685 = vmatprep.subr.bf16.mxu0 0
    %1686 = vmatpush2.bf16.msra.mxu0 0
    %1687 = vmatprep.mubr.bf16.mxu0 0
    %1688 = vmatmul.mubr.bf16.gmra.mxu0 %v1589
    %v1689 = vpop.f32.mrf.mxu0
    %v1690 = vadd.f32 %v1606, %v1689
    %v1691 = vpop.f32.mrf.mxu0
    %v1692 = vpop.f32.mrf.mxu0
    %v1693 = vpop.f32.mrf.mxu0
    %1694 = vdwg.mxu0
    %v1695 = vmax.f32 %v1690, 0.0
    %v1696 = vpack.c.bf16 %v1695, %v1695
    %v1697 = vld [vmem:[%s6] sm:$0xf]
    %v1698 = vld [vmem:[%s6 + $0x4] sm:$0xf]
    %v1699 = vld [vmem:[%s6 + $0x8] sm:$0xf]
    %v1700 = vld [vmem:[%s6 + $0xc] sm:$0xf]
    %v1701 = vld [vmem:[%s6 + $0x10] sm:$0xf]
    %v1702 = vld [vmem:[%s6 + $0x14] sm:$0xf]
    %v1703 = vld [vmem:[%s6 + $0x18] sm:$0xf]
    %v1704 = vld [vmem:[%s6 + $0x1c] sm:$0xf]
    %v1705 = vld [vmem:[%s6 + $0x20] sm:$0xf]
    %v1706 = vld [vmem:[%s6 + $0x24] sm:$0xf]
    %v1707 = vld [vmem:[%s6 + $0x28] sm:$0xf]
    %v1708 = vld [vmem:[%s6 + $0x2c] sm:$0xf]
    %v1709 = vld [vmem:[%s6 + $0x30] sm:$0xf]
    %v1710 = vld [vmem:[%s6 + $0x34] sm:$0xf]
    %v1711 = vld [vmem:[%s6 + $0x38] sm:$0xf]
    %v1712 = vld [vmem:[%s6 + $0x3c] sm:$0xf]
    %v1713 = vld [vmem:[%s7 + $0x11] ss:$0 sm:$0xff]
    %v1730 = vunpack.c.l.b16 %v1697
    %v1731 = vunpack.c.l.b16 %v1698
    %v1732 = vunpack.c.l.b16 %v1699
    %v1733 = vunpack.c.l.b16 %v1700
    %v1734 = vunpack.c.l.b16 %v1701
    %v1735 = vunpack.c.l.b16 %v1702
    %v1736 = vunpack.c.l.b16 %v1703
    %v1737 = vunpack.c.l.b16 %v1704
    %v1738 = vunpack.c.l.b16 %v1705
    %v1739 = vunpack.c.l.b16 %v1706
    %v1740 = vunpack.c.l.b16 %v1707
    %v1741 = vunpack.c.l.b16 %v1708
    %v1742 = vunpack.c.l.b16 %v1709
    %v1743 = vunpack.c.l.b16 %v1710
    %v1744 = vunpack.c.l.b16 %v1711
    %v1745 = vunpack.c.l.b16 %v1712
    %v1746 = vpack.c.b16 %v1731, %v1730
    %v1747 = vpack.c.b16 %v1733, %v1732
    %v1748 = vpack.c.b16 %v1735, %v1734
    %v1749 = vpack.c.b16 %v1737, %v1736
    %v1750 = vpack.c.b16 %v1739, %v1738
    %v1751 = vpack.c.b16 %v1741, %v1740
    %v1752 = vpack.c.b16 %v1743, %v1742
    %v1753 = vpack.c.b16 %v1745, %v1744
    %1762 = vmatprep.subr.bf16.mxu0 0
    %1763 = vmatpush1.bf16.msra.mxu0 %v1753
    %1764 = vmatprep.subr.bf16.mxu0 0
    %1765 = vmatpush1.bf16.msra.mxu0 %v1752
    %1766 = vmatprep.subr.bf16.mxu0 0
    %1767 = vmatpush1.bf16.msra.mxu0 %v1751
    %1768 = vmatprep.subr.bf16.mxu0 0
    %1769 = vmatpush1.bf16.msra.mxu0 %v1750
    %1770 = vmatprep.subr.bf16.mxu0 0
    %1771 = vmatpush1.bf16.msra.mxu0 %v1749
    %1772 = vmatprep.subr.bf16.mxu0 0
    %1773 = vmatpush1.bf16.msra.mxu0 %v1748
    %1774 = vmatprep.subr.bf16.mxu0 0
    %1775 = vmatpush1.bf16.msra.mxu0 %v1747
    %1776 = vmatprep.subr.bf16.mxu0 0
    %1777 = vmatpush1.bf16.msra.mxu0 %v1746
    %1778 = vmatprep.subr.bf16.mxu0 0
    %1779 = vmatpush2.bf16.msra.mxu0 0
    %1780 = vmatprep.subr.bf16.mxu0 0
    %1781 = vmatpush2.bf16.msra.mxu0 0
    %1782 = vmatprep.subr.bf16.mxu0 0
    %1783 = vmatpush2.bf16.msra.mxu0 0
    %1784 = vmatprep.subr.bf16.mxu0 0
    %1785 = vmatpush2.bf16.msra.mxu0 0
    %1786 = vmatprep.subr.bf16.mxu0 0
    %1787 = vmatpush2.bf16.msra.mxu0 0
    %1788 = vmatprep.subr.bf16.mxu0 0
    %1789 = vmatpush2.bf16.msra.mxu0 0
    %1790 = vmatprep.subr.bf16.mxu0 0
    %1791 = vmatpush2.bf16.msra.mxu0 0
    %1792 = vmatprep.subr.bf16.mxu0 0
    %1793 = vmatpush2.bf16.msra.mxu0 0
    %1794 = vmatprep.mubr.bf16.mxu0 0
    %1795 = vmatmul.mubr.bf16.gmra.mxu0 %v1696
    %v1796 = vpop.f32.mrf.mxu0
    %v1797 = vadd.f32 %v1713, %v1796
    %v1798 = vpop.f32.mrf.mxu0
    %v1799 = vpop.f32.mrf.mxu0
    %v1800 = vpop.f32.mrf.mxu0
    %1801 = vdwg.mxu0
    %vm1802 = vcmask 123904
    %1803 = vst.msk [vmem:[#allocation8] sm:$0x3] %vm1802, %v1797
    // Predicated region
    $region46: #{forward.1} parent=1 // pred_check
      _
    $region47: #{forward.1} parent=1 // pred_check_branch
      %1805 = sbr.rel (0) target = $region49
    $region48: #{forward.1} parent=1 // pred_region
      %s1807 = ssub.s32 32, 32
      %1808 = vsyncadd [#allocation4], %s1807
      %s1810 = sshll.u32 [#allocation8], 4
      %s1811 = int_to_ptr.vmem [resolvable:$true] %s1810
      %1813 = dma.vmem_to_hbm [thread:$0]  %s1811, 32, %s8, [#allocation4]
    $region49: #{forward.1} parent=1 // pred_fallthru
      _
    // Predicated region
    $region50: #{forward.1} parent=1 // pred_check
      _
    $region51: #{forward.1} parent=1 // pred_check_branch
      %1815 = sbr.rel (0) target = $region53
    $region52: #{forward.1} parent=1 // pred_region
      %1816 = dma.done [#allocation4], 32
    $region53: #{forward.1} parent=1 // pred_fallthru
      _
    %1817 = vsyncpa [#allocation3], 1
    %1818 = vsyncpa [#allocation6], 1
    %1819 = vsyncpa [#allocation4], 1

</llo_original>
